<compile_context>
chip_gen: v7x
topology: tpu7x:2x2x1
jax: 0.10.0
libtpu: 0.0.40
codegen_flags: <defaults>
</compile_context>

<pallas_src>
import functools

import jax
import jax.numpy as jnp
from jax.experimental import pallas as pl
from jax.experimental.pallas import tpu as pltpu


# Tap offsets (dy, dx) in conv order: tap index k = ky*3 + kx, dy = ky-1, dx = kx-1.
_TAPS = tuple((ky - 1, kx - 1) for ky in range(3) for kx in range(3))


def _resblock_kernel(x_ref, w1_ref, w2_ref, o_ref, *, H, W, mm_dtype):
    HW = H * W
    x = x_ref[0]  # (R, HW) float32, R = b_tile * C (one row = one (sample, channel) plane)

    # ---- hoisted edge masks (built once, shared by both convs) -------------
    pos = jax.lax.broadcasted_iota(jnp.int32, (1, HW), 1)
    if W & (W - 1) == 0:                       # static power-of-two fast path
        col = jnp.bitwise_and(pos, W - 1)
    else:
        col = jax.lax.rem(pos, W)
    row_ok = {
        -1: (pos >= W),                        # dy = -1  -> need i >= 1
        1: (pos < (H - 1) * W),                # dy = +1  -> need i <= H-2
    }
    col_ok = {
        -1: (col >= 1),                        # dx = -1  -> need j >= 1
        1: (col <= W - 2),                     # dx = +1  -> need j <= W-2
    }

    def tap_mask(dy, dx):
        m = None
        if dy != 0:
            m = row_ok[dy]
        if dx != 0:
            m = col_ok[dx] if m is None else jnp.logical_and(m, col_ok[dx])
        return m.astype(jnp.float32)           # (1, HW) {0,1}, broadcast over rows

    masks = {t: tap_mask(*t) for t in _TAPS if t != (0, 0)}

    def conv3x3(a, w_ref):
        # a: (R, HW) f32; w_ref: (9, R, R) taps. Center tap initializes the
        # accumulator; remaining 8 taps are a tight back-to-back dot chain.
        acc = jnp.dot(w_ref[4], a.astype(mm_dtype),
                      preferred_element_type=jnp.float32)
        for k, (dy, dx) in enumerate(_TAPS):
            if dy == 0 and dx == 0:
                continue
            shift = (-(dy * W + dx)) % HW                 # static rotate amount
            s = pltpu.roll(a, shift, 1)                   # XLU lane rotate
            s = s * masks[(dy, dx)]                       # zero padding at edges
            acc = acc + jnp.dot(w_ref[k], s.astype(mm_dtype),
                                preferred_element_type=jnp.float32)
        return acc

    def inorm_relu(y):
        # InstanceNorm2d defaults: eps=1e-5, biased variance, affine=False.
        inv_n = 1.0 / HW
        s1 = jnp.sum(y, axis=1, keepdims=True)
        s2 = jnp.sum(y * y, axis=1, keepdims=True)
        m = s1 * inv_n
        v = jnp.maximum(s2 * inv_n - m * m, 0.0)          # guard f32 cancellation
        return jnp.maximum((y - m) * jax.lax.rsqrt(v + 1e-5), 0.0)

    h = inorm_relu(conv3x3(x, w1_ref))
    h = inorm_relu(conv3x3(h, w2_ref))
    o_ref[0] = (x + h).astype(o_ref.dtype)


def _block_diag_taps(w_taps, b_tile):
    """(9, C, C) -> (9, b*C, b*C) block-diagonal (weights shared per sample)."""
    if b_tile == 1:
        return w_taps
    C = w_taps.shape[-1]
    out = jnp.zeros((9, b_tile * C, b_tile * C), w_taps.dtype)
    for i in range(b_tile):
        out = out.at[:, i * C:(i + 1) * C, i * C:(i + 1) * C].set(w_taps)
    return out


def _pick_b_tile(N, C):
    """Fold samples onto sublanes when C is small; must divide N."""
    b = min(N, max(1, 8 // C))
    while b > 1 and N % b:
        b -= 1
    return b


def residual_block(x, w1, b1, w2, b2, *, b_tile=None, matmul_dtype=jnp.float32):
    """CycleGAN ResidualBlock forward.

    x: (N, C, H, W) float32; w*: (C, C, 3, 3) PyTorch OIHW; b*: (C,).
    Conv biases are accepted for API parity but unused: InstanceNorm2d with
    affine=False cancels a per-channel bias exactly.
    Set matmul_dtype=jnp.bfloat16 on v6e/v7x when ~1e-2 error is acceptable.
    """
    del b1, b2  # algebraically cancelled by affine-free InstanceNorm
    N, C, H, W = x.shape
    HW = H * W
    if b_tile is None:
        b_tile = _pick_b_tile(N, C)
    assert N % b_tile == 0
    G = N // b_tile          # grid length
    R = b_tile * C           # sublane rows per grid step

    # Wrapper-side glue only: lane-dense activation slab + (9, R, R) tap weights.
    x2 = x.reshape(G, R, HW)
    w1p = _block_diag_taps(
        jnp.transpose(w1, (2, 3, 0, 1)).reshape(9, C, C), b_tile
    ).astype(matmul_dtype)
    w2p = _block_diag_taps(
        jnp.transpose(w2, (2, 3, 0, 1)).reshape(9, C, C), b_tile
    ).astype(matmul_dtype)

    kernel = functools.partial(_resblock_kernel, H=H, W=W, mm_dtype=matmul_dtype)

    out = pl.pallas_call(
        kernel,
        out_shape=jax.ShapeDtypeStruct((G, R, HW), x.dtype),
        grid_spec=pltpu.PrefetchScalarGridSpec(
            num_scalar_prefetch=0,
            grid=(G,),
            in_specs=[
                pl.BlockSpec((1, R, HW), lambda g: (g, 0, 0)),
                pl.BlockSpec((9, R, R), lambda g: (0, 0, 0)),
                pl.BlockSpec((9, R, R), lambda g: (0, 0, 0)),
            ],
            out_specs=pl.BlockSpec((1, R, HW), lambda g: (g, 0, 0)),
        ),
        compiler_params=pltpu.CompilerParams(
            dimension_semantics=("parallel",),
            # Explicit VMEM budget (v7x has only 64 MiB physical; default
            # scoped limit is lower). For production CycleGAN shapes
            # (C=256, 64x64) additionally tile the grid over H*W chunks.
            vmem_limit_bytes=48 * 1024 * 1024,
        ),
    )(x2, w1p, w2p)
    return out.reshape(N, C, H, W)


def ref_forward(x, w1, b1, w2, b2):
    """Pure-JAX reference of the PyTorch module's forward (biases included)."""
    def conv(a, w, b):
        y = jax.lax.conv_general_dilated(
            a, w, (1, 1), ((1, 1), (1, 1)),
            dimension_numbers=("NCHW", "OIHW", "NCHW"))
        return y + b[None, :, None, None]

    def inorm_relu(y):
        m = y.mean(axis=(2, 3), keepdims=True)
        v = ((y - m) ** 2).mean(axis=(2, 3), keepdims=True)
        return jnp.maximum((y - m) * jax.lax.rsqrt(v + 1e-5), 0.0)

    h = inorm_relu(conv(x, w1, b1))
    h = inorm_relu(conv(h, w2, b2))
    return x + h


if __name__ == "__main__":
    N, C, H, W = 2, 4, 16, 16
    key = jax.random.PRNGKey(0)
    k1, k2, k3, k4, k5 = jax.random.split(key, 5)
    x = jax.random.normal(k1, (N, C, H, W), jnp.float32)
    # Parameter shapes per nn.Conv2d(C, C, kernel_size=3, stride=1, padding=1).
    w1 = 0.2 * jax.random.normal(k2, (C, C, 3, 3), jnp.float32)
    b1 = 0.1 * jax.random.normal(k3, (C,), jnp.float32)
    w2 = 0.2 * jax.random.normal(k4, (C, C, 3, 3), jnp.float32)
    b2 = 0.1 * jax.random.normal(k5, (C,), jnp.float32)

    out = jax.block_until_ready(residual_block(x, w1, b1, w2, b2))
    ref = ref_forward(x, w1, b1, w2, b2)

    assert out.shape == x.shape and out.dtype == x.dtype
    max_err = float(jnp.max(jnp.abs(out - ref)))
    if max_err < 1e-3:
        print("KERNEL_OK")
    else:
        raise AssertionError(f"mismatch vs reference, max_err={max_err}")
</pallas_src>

<mosaic_0001>
module attributes {stable_mosaic.version = 11 : i64} {
  func.func @_resblock_kernel(%arg0: i32, %arg1: memref<1x8x256xf32, #tpu.memory_space<vmem>>, %arg2: memref<9x8x8xf32, #tpu.memory_space<vmem>>, %arg3: memref<9x8x8xf32, #tpu.memory_space<vmem>>, %arg4: memref<1x8x256xf32, #tpu.memory_space<vmem>>) attributes {dimension_semantics = [#tpu.dimension_semantics<parallel>], iteration_bounds = array<i64: 1>, scalar_prefetch = 0 : i64, scratch_operands = 0 : i64, tpu.core_type = #tpu.core_type<tc>, window_params = [{transform_indices = @transform_0, window_bounds = array<i64: 1, 8, 256>}, {pipeline_mode = #tpu.pipeline_mode<synchronous>, transform_indices = @transform_1, window_bounds = array<i64: 9, 8, 8>}, {pipeline_mode = #tpu.pipeline_mode<synchronous>, transform_indices = @transform_2, window_bounds = array<i64: 9, 8, 8>}, {transform_indices = @transform_3, window_bounds = array<i64: 1, 8, 256>}]} {
    %c0 = arith.constant 0 : index
    %c0_0 = arith.constant 0 : index
    %c0_1 = arith.constant 0 : index
    %0 = vector.load %arg1[%c0, %c0_0, %c0_1] : memref<1x8x256xf32, #tpu.memory_space<vmem>>, vector<1x8x256xf32>
    %1 = vector.shape_cast %0 : vector<1x8x256xf32> to vector<8x256xf32>
    %2 = tpu.iota {dimensions = array<i32: 1>} : vector<1x256xi32>
    %c15_i32 = arith.constant 15 : i32
    %3 = vector.broadcast %c15_i32 : i32 to vector<1x256xi32>
    %4 = arith.andi %2, %3 : vector<1x256xi32>
    %c16_i32 = arith.constant 16 : i32
    %5 = vector.broadcast %c16_i32 : i32 to vector<1x256xi32>
    %6 = arith.cmpi sge, %2, %5 : vector<1x256xi32>
    %c240_i32 = arith.constant 240 : i32
    %7 = vector.broadcast %c240_i32 : i32 to vector<1x256xi32>
    %8 = arith.cmpi slt, %2, %7 : vector<1x256xi32>
    %c1_i32 = arith.constant 1 : i32
    %9 = vector.broadcast %c1_i32 : i32 to vector<1x256xi32>
    %10 = arith.cmpi sge, %4, %9 : vector<1x256xi32>
    %c14_i32 = arith.constant 14 : i32
    %11 = vector.broadcast %c14_i32 : i32 to vector<1x256xi32>
    %12 = arith.cmpi sle, %4, %11 : vector<1x256xi32>
    %13 = arith.andi %6, %10 : vector<1x256xi1>
    %14 = arith.extui %13 : vector<1x256xi1> to vector<1x256xi32>
    %15 = arith.sitofp %14 : vector<1x256xi32> to vector<1x256xf32>
    %16 = arith.extui %6 : vector<1x256xi1> to vector<1x256xi32>
    %17 = arith.sitofp %16 : vector<1x256xi32> to vector<1x256xf32>
    %18 = arith.andi %6, %12 : vector<1x256xi1>
    %19 = arith.extui %18 : vector<1x256xi1> to vector<1x256xi32>
    %20 = arith.sitofp %19 : vector<1x256xi32> to vector<1x256xf32>
    %21 = arith.extui %10 : vector<1x256xi1> to vector<1x256xi32>
    %22 = arith.sitofp %21 : vector<1x256xi32> to vector<1x256xf32>
    %23 = arith.extui %12 : vector<1x256xi1> to vector<1x256xi32>
    %24 = arith.sitofp %23 : vector<1x256xi32> to vector<1x256xf32>
    %25 = arith.andi %8, %10 : vector<1x256xi1>
    %26 = arith.extui %25 : vector<1x256xi1> to vector<1x256xi32>
    %27 = arith.sitofp %26 : vector<1x256xi32> to vector<1x256xf32>
    %28 = arith.extui %8 : vector<1x256xi1> to vector<1x256xi32>
    %29 = arith.sitofp %28 : vector<1x256xi32> to vector<1x256xf32>
    %30 = arith.andi %8, %12 : vector<1x256xi1>
    %31 = arith.extui %30 : vector<1x256xi1> to vector<1x256xi32>
    %32 = arith.sitofp %31 : vector<1x256xi32> to vector<1x256xf32>
    %c4 = arith.constant 4 : index
    %c0_2 = arith.constant 0 : index
    %c0_3 = arith.constant 0 : index
    %33 = vector.load %arg2[%c4, %c0_2, %c0_3] : memref<9x8x8xf32, #tpu.memory_space<vmem>>, vector<1x8x8xf32>
    %34 = vector.shape_cast %33 : vector<1x8x8xf32> to vector<8x8xf32>
    %cst = arith.constant dense<0.000000e+00> : vector<8x256xf32>
    %35 = tpu.matmul %34, %1, %cst {dimension_numbers = #tpu.dot_dimension_numbers<[1], [0], [0], [1], [0, 0, 1, 1], [], []>} : vector<8x8xf32>, vector<8x256xf32>, vector<8x256xf32> -> vector<8x256xf32>
    %c17_i32 = arith.constant 17 : i32
    %36 = tpu.dynamic_rotate %1 by %c17_i32 dim 1 : vector<8x256xf32>, i32 -> vector<8x256xf32>
    %37 = vector.broadcast %15 : vector<1x256xf32> to vector<8x256xf32>
    %38 = arith.mulf %36, %37 : vector<8x256xf32>
    %c0_4 = arith.constant 0 : index
    %c0_5 = arith.constant 0 : index
    %c0_6 = arith.constant 0 : index
    %39 = vector.load %arg2[%c0_4, %c0_5, %c0_6] : memref<9x8x8xf32, #tpu.memory_space<vmem>>, vector<1x8x8xf32>
    %40 = vector.shape_cast %39 : vector<1x8x8xf32> to vector<8x8xf32>
    %cst_7 = arith.constant dense<0.000000e+00> : vector<8x256xf32>
    %41 = tpu.matmul %40, %38, %cst_7 {dimension_numbers = #tpu.dot_dimension_numbers<[1], [0], [0], [1], [0, 0, 1, 1], [], []>} : vector<8x8xf32>, vector<8x256xf32>, vector<8x256xf32> -> vector<8x256xf32>
    %42 = arith.addf %35, %41 : vector<8x256xf32>
    %c16_i32_8 = arith.constant 16 : i32
    %43 = tpu.dynamic_rotate %1 by %c16_i32_8 dim 1 : vector<8x256xf32>, i32 -> vector<8x256xf32>
    %44 = vector.broadcast %17 : vector<1x256xf32> to vector<8x256xf32>
    %45 = arith.mulf %43, %44 : vector<8x256xf32>
    %c1 = arith.constant 1 : index
    %c0_9 = arith.constant 0 : index
    %c0_10 = arith.constant 0 : index
    %46 = vector.load %arg2[%c1, %c0_9, %c0_10] : memref<9x8x8xf32, #tpu.memory_space<vmem>>, vector<1x8x8xf32>
    %47 = vector.shape_cast %46 : vector<1x8x8xf32> to vector<8x8xf32>
    %cst_11 = arith.constant dense<0.000000e+00> : vector<8x256xf32>
    %48 = tpu.matmul %47, %45, %cst_11 {dimension_numbers = #tpu.dot_dimension_numbers<[1], [0], [0], [1], [0, 0, 1, 1], [], []>} : vector<8x8xf32>, vector<8x256xf32>, vector<8x256xf32> -> vector<8x256xf32>
    %49 = arith.addf %42, %48 : vector<8x256xf32>
    %c15_i32_12 = arith.constant 15 : i32
    %50 = tpu.dynamic_rotate %1 by %c15_i32_12 dim 1 : vector<8x256xf32>, i32 -> vector<8x256xf32>
    %51 = vector.broadcast %20 : vector<1x256xf32> to vector<8x256xf32>
    %52 = arith.mulf %50, %51 : vector<8x256xf32>
    %c2 = arith.constant 2 : index
    %c0_13 = arith.constant 0 : index
    %c0_14 = arith.constant 0 : index
    %53 = vector.load %arg2[%c2, %c0_13, %c0_14] : memref<9x8x8xf32, #tpu.memory_space<vmem>>, vector<1x8x8xf32>
    %54 = vector.shape_cast %53 : vector<1x8x8xf32> to vector<8x8xf32>
    %cst_15 = arith.constant dense<0.000000e+00> : vector<8x256xf32>
    %55 = tpu.matmul %54, %52, %cst_15 {dimension_numbers = #tpu.dot_dimension_numbers<[1], [0], [0], [1], [0, 0, 1, 1], [], []>} : vector<8x8xf32>, vector<8x256xf32>, vector<8x256xf32> -> vector<8x256xf32>
    %56 = arith.addf %49, %55 : vector<8x256xf32>
    %c1_i32_16 = arith.constant 1 : i32
    %57 = tpu.dynamic_rotate %1 by %c1_i32_16 dim 1 : vector<8x256xf32>, i32 -> vector<8x256xf32>
    %58 = vector.broadcast %22 : vector<1x256xf32> to vector<8x256xf32>
    %59 = arith.mulf %57, %58 : vector<8x256xf32>
    %c3 = arith.constant 3 : index
    %c0_17 = arith.constant 0 : index
    %c0_18 = arith.constant 0 : index
    %60 = vector.load %arg2[%c3, %c0_17, %c0_18] : memref<9x8x8xf32, #tpu.memory_space<vmem>>, vector<1x8x8xf32>
    %61 = vector.shape_cast %60 : vector<1x8x8xf32> to vector<8x8xf32>
    %cst_19 = arith.constant dense<0.000000e+00> : vector<8x256xf32>
    %62 = tpu.matmul %61, %59, %cst_19 {dimension_numbers = #tpu.dot_dimension_numbers<[1], [0], [0], [1], [0, 0, 1, 1], [], []>} : vector<8x8xf32>, vector<8x256xf32>, vector<8x256xf32> -> vector<8x256xf32>
    %63 = arith.addf %56, %62 : vector<8x256xf32>
    %c255_i32 = arith.constant 255 : i32
    %64 = tpu.dynamic_rotate %1 by %c255_i32 dim 1 : vector<8x256xf32>, i32 -> vector<8x256xf32>
    %65 = vector.broadcast %24 : vector<1x256xf32> to vector<8x256xf32>
    %66 = arith.mulf %64, %65 : vector<8x256xf32>
    %c5 = arith.constant 5 : index
    %c0_20 = arith.constant 0 : index
    %c0_21 = arith.constant 0 : index
    %67 = vector.load %arg2[%c5, %c0_20, %c0_21] : memref<9x8x8xf32, #tpu.memory_space<vmem>>, vector<1x8x8xf32>
    %68 = vector.shape_cast %67 : vector<1x8x8xf32> to vector<8x8xf32>
    %cst_22 = arith.constant dense<0.000000e+00> : vector<8x256xf32>
    %69 = tpu.matmul %68, %66, %cst_22 {dimension_numbers = #tpu.dot_dimension_numbers<[1], [0], [0], [1], [0, 0, 1, 1], [], []>} : vector<8x8xf32>, vector<8x256xf32>, vector<8x256xf32> -> vector<8x256xf32>
    %70 = arith.addf %63, %69 : vector<8x256xf32>
    %c241_i32 = arith.constant 241 : i32
    %71 = tpu.dynamic_rotate %1 by %c241_i32 dim 1 : vector<8x256xf32>, i32 -> vector<8x256xf32>
    %72 = vector.broadcast %27 : vector<1x256xf32> to vector<8x256xf32>
    %73 = arith.mulf %71, %72 : vector<8x256xf32>
    %c6 = arith.constant 6 : index
    %c0_23 = arith.constant 0 : index
    %c0_24 = arith.constant 0 : index
    %74 = vector.load %arg2[%c6, %c0_23, %c0_24] : memref<9x8x8xf32, #tpu.memory_space<vmem>>, vector<1x8x8xf32>
    %75 = vector.shape_cast %74 : vector<1x8x8xf32> to vector<8x8xf32>
    %cst_25 = arith.constant dense<0.000000e+00> : vector<8x256xf32>
    %76 = tpu.matmul %75, %73, %cst_25 {dimension_numbers = #tpu.dot_dimension_numbers<[1], [0], [0], [1], [0, 0, 1, 1], [], []>} : vector<8x8xf32>, vector<8x256xf32>, vector<8x256xf32> -> vector<8x256xf32>
    %77 = arith.addf %70, %76 : vector<8x256xf32>
    %c240_i32_26 = arith.constant 240 : i32
    %78 = tpu.dynamic_rotate %1 by %c240_i32_26 dim 1 : vector<8x256xf32>, i32 -> vector<8x256xf32>
    %79 = vector.broadcast %29 : vector<1x256xf32> to vector<8x256xf32>
    %80 = arith.mulf %78, %79 : vector<8x256xf32>
    %c7 = arith.constant 7 : index
    %c0_27 = arith.constant 0 : index
    %c0_28 = arith.constant 0 : index
    %81 = vector.load %arg2[%c7, %c0_27, %c0_28] : memref<9x8x8xf32, #tpu.memory_space<vmem>>, vector<1x8x8xf32>
    %82 = vector.shape_cast %81 : vector<1x8x8xf32> to vector<8x8xf32>
    %cst_29 = arith.constant dense<0.000000e+00> : vector<8x256xf32>
    %83 = tpu.matmul %82, %80, %cst_29 {dimension_numbers = #tpu.dot_dimension_numbers<[1], [0], [0], [1], [0, 0, 1, 1], [], []>} : vector<8x8xf32>, vector<8x256xf32>, vector<8x256xf32> -> vector<8x256xf32>
    %84 = arith.addf %77, %83 : vector<8x256xf32>
    %c239_i32 = arith.constant 239 : i32
    %85 = tpu.dynamic_rotate %1 by %c239_i32 dim 1 : vector<8x256xf32>, i32 -> vector<8x256xf32>
    %86 = vector.broadcast %32 : vector<1x256xf32> to vector<8x256xf32>
    %87 = arith.mulf %85, %86 : vector<8x256xf32>
    %c8 = arith.constant 8 : index
    %c0_30 = arith.constant 0 : index
    %c0_31 = arith.constant 0 : index
    %88 = vector.load %arg2[%c8, %c0_30, %c0_31] : memref<9x8x8xf32, #tpu.memory_space<vmem>>, vector<1x8x8xf32>
    %89 = vector.shape_cast %88 : vector<1x8x8xf32> to vector<8x8xf32>
    %cst_32 = arith.constant dense<0.000000e+00> : vector<8x256xf32>
    %90 = tpu.matmul %89, %87, %cst_32 {dimension_numbers = #tpu.dot_dimension_numbers<[1], [0], [0], [1], [0, 0, 1, 1], [], []>} : vector<8x8xf32>, vector<8x256xf32>, vector<8x256xf32> -> vector<8x256xf32>
    %91 = arith.addf %84, %90 : vector<8x256xf32>
    %cst_33 = arith.constant dense<0.000000e+00> : vector<8xf32>
    %92 = vector.multi_reduction <add>, %91, %cst_33 [1] : vector<8x256xf32> to vector<8xf32>
    %93 = vector.shape_cast %92 : vector<8xf32> to vector<8x1xf32>
    %94 = arith.mulf %91, %91 : vector<8x256xf32>
    %cst_34 = arith.constant dense<0.000000e+00> : vector<8xf32>
    %95 = vector.multi_reduction <add>, %94, %cst_34 [1] : vector<8x256xf32> to vector<8xf32>
    %96 = vector.shape_cast %95 : vector<8xf32> to vector<8x1xf32>
    %cst_35 = arith.constant 3.906250e-03 : f32
    %97 = vector.broadcast %cst_35 : f32 to vector<8x1xf32>
    %98 = arith.mulf %93, %97 : vector<8x1xf32>
    %cst_36 = arith.constant 3.906250e-03 : f32
    %99 = vector.broadcast %cst_36 : f32 to vector<8x1xf32>
    %100 = arith.mulf %96, %99 : vector<8x1xf32>
    %101 = arith.mulf %98, %98 : vector<8x1xf32>
    %102 = arith.subf %100, %101 : vector<8x1xf32>
    %cst_37 = arith.constant 0.000000e+00 : f32
    %103 = vector.broadcast %cst_37 : f32 to vector<8x1xf32>
    %104 = arith.maximumf %102, %103 : vector<8x1xf32>
    %105 = vector.broadcast %98 : vector<8x1xf32> to vector<8x256xf32>
    %106 = arith.subf %91, %105 : vector<8x256xf32>
    %cst_38 = arith.constant 9.99999974E-6 : f32
    %107 = vector.broadcast %cst_38 : f32 to vector<8x1xf32>
    %108 = arith.addf %104, %107 : vector<8x1xf32>
    %109 = math.rsqrt %108 : vector<8x1xf32>
    %110 = vector.broadcast %109 : vector<8x1xf32> to vector<8x256xf32>
    %111 = arith.mulf %106, %110 : vector<8x256xf32>
    %cst_39 = arith.constant 0.000000e+00 : f32
    %112 = vector.broadcast %cst_39 : f32 to vector<8x256xf32>
    %113 = arith.maximumf %111, %112 : vector<8x256xf32>
    %c4_40 = arith.constant 4 : index
    %c0_41 = arith.constant 0 : index
    %c0_42 = arith.constant 0 : index
    %114 = vector.load %arg3[%c4_40, %c0_41, %c0_42] : memref<9x8x8xf32, #tpu.memory_space<vmem>>, vector<1x8x8xf32>
    %115 = vector.shape_cast %114 : vector<1x8x8xf32> to vector<8x8xf32>
    %cst_43 = arith.constant dense<0.000000e+00> : vector<8x256xf32>
    %116 = tpu.matmul %115, %113, %cst_43 {dimension_numbers = #tpu.dot_dimension_numbers<[1], [0], [0], [1], [0, 0, 1, 1], [], []>} : vector<8x8xf32>, vector<8x256xf32>, vector<8x256xf32> -> vector<8x256xf32>
    %c17_i32_44 = arith.constant 17 : i32
    %117 = tpu.dynamic_rotate %113 by %c17_i32_44 dim 1 : vector<8x256xf32>, i32 -> vector<8x256xf32>
    %118 = vector.broadcast %15 : vector<1x256xf32> to vector<8x256xf32>
    %119 = arith.mulf %117, %118 : vector<8x256xf32>
    %c0_45 = arith.constant 0 : index
    %c0_46 = arith.constant 0 : index
    %c0_47 = arith.constant 0 : index
    %120 = vector.load %arg3[%c0_45, %c0_46, %c0_47] : memref<9x8x8xf32, #tpu.memory_space<vmem>>, vector<1x8x8xf32>
    %121 = vector.shape_cast %120 : vector<1x8x8xf32> to vector<8x8xf32>
    %cst_48 = arith.constant dense<0.000000e+00> : vector<8x256xf32>
    %122 = tpu.matmul %121, %119, %cst_48 {dimension_numbers = #tpu.dot_dimension_numbers<[1], [0], [0], [1], [0, 0, 1, 1], [], []>} : vector<8x8xf32>, vector<8x256xf32>, vector<8x256xf32> -> vector<8x256xf32>
    %123 = arith.addf %116, %122 : vector<8x256xf32>
    %c16_i32_49 = arith.constant 16 : i32
    %124 = tpu.dynamic_rotate %113 by %c16_i32_49 dim 1 : vector<8x256xf32>, i32 -> vector<8x256xf32>
    %125 = vector.broadcast %17 : vector<1x256xf32> to vector<8x256xf32>
    %126 = arith.mulf %124, %125 : vector<8x256xf32>
    %c1_50 = arith.constant 1 : index
    %c0_51 = arith.constant 0 : index
    %c0_52 = arith.constant 0 : index
    %127 = vector.load %arg3[%c1_50, %c0_51, %c0_52] : memref<9x8x8xf32, #tpu.memory_space<vmem>>, vector<1x8x8xf32>
    %128 = vector.shape_cast %127 : vector<1x8x8xf32> to vector<8x8xf32>
    %cst_53 = arith.constant dense<0.000000e+00> : vector<8x256xf32>
    %129 = tpu.matmul %128, %126, %cst_53 {dimension_numbers = #tpu.dot_dimension_numbers<[1], [0], [0], [1], [0, 0, 1, 1], [], []>} : vector<8x8xf32>, vector<8x256xf32>, vector<8x256xf32> -> vector<8x256xf32>
    %130 = arith.addf %123, %129 : vector<8x256xf32>
    %c15_i32_54 = arith.constant 15 : i32
    %131 = tpu.dynamic_rotate %113 by %c15_i32_54 dim 1 : vector<8x256xf32>, i32 -> vector<8x256xf32>
    %132 = vector.broadcast %20 : vector<1x256xf32> to vector<8x256xf32>
    %133 = arith.mulf %131, %132 : vector<8x256xf32>
    %c2_55 = arith.constant 2 : index
    %c0_56 = arith.constant 0 : index
    %c0_57 = arith.constant 0 : index
    %134 = vector.load %arg3[%c2_55, %c0_56, %c0_57] : memref<9x8x8xf32, #tpu.memory_space<vmem>>, vector<1x8x8xf32>
    %135 = vector.shape_cast %134 : vector<1x8x8xf32> to vector<8x8xf32>
    %cst_58 = arith.constant dense<0.000000e+00> : vector<8x256xf32>
    %136 = tpu.matmul %135, %133, %cst_58 {dimension_numbers = #tpu.dot_dimension_numbers<[1], [0], [0], [1], [0, 0, 1, 1], [], []>} : vector<8x8xf32>, vector<8x256xf32>, vector<8x256xf32> -> vector<8x256xf32>
    %137 = arith.addf %130, %136 : vector<8x256xf32>
    %c1_i32_59 = arith.constant 1 : i32
    %138 = tpu.dynamic_rotate %113 by %c1_i32_59 dim 1 : vector<8x256xf32>, i32 -> vector<8x256xf32>
    %139 = vector.broadcast %22 : vector<1x256xf32> to vector<8x256xf32>
    %140 = arith.mulf %138, %139 : vector<8x256xf32>
    %c3_60 = arith.constant 3 : index
    %c0_61 = arith.constant 0 : index
    %c0_62 = arith.constant 0 : index
    %141 = vector.load %arg3[%c3_60, %c0_61, %c0_62] : memref<9x8x8xf32, #tpu.memory_space<vmem>>, vector<1x8x8xf32>
    %142 = vector.shape_cast %141 : vector<1x8x8xf32> to vector<8x8xf32>
    %cst_63 = arith.constant dense<0.000000e+00> : vector<8x256xf32>
    %143 = tpu.matmul %142, %140, %cst_63 {dimension_numbers = #tpu.dot_dimension_numbers<[1], [0], [0], [1], [0, 0, 1, 1], [], []>} : vector<8x8xf32>, vector<8x256xf32>, vector<8x256xf32> -> vector<8x256xf32>
    %144 = arith.addf %137, %143 : vector<8x256xf32>
    %c255_i32_64 = arith.constant 255 : i32
    %145 = tpu.dynamic_rotate %113 by %c255_i32_64 dim 1 : vector<8x256xf32>, i32 -> vector<8x256xf32>
    %146 = vector.broadcast %24 : vector<1x256xf32> to vector<8x256xf32>
    %147 = arith.mulf %145, %146 : vector<8x256xf32>
    %c5_65 = arith.constant 5 : index
    %c0_66 = arith.constant 0 : index
    %c0_67 = arith.constant 0 : index
    %148 = vector.load %arg3[%c5_65, %c0_66, %c0_67] : memref<9x8x8xf32, #tpu.memory_space<vmem>>, vector<1x8x8xf32>
    %149 = vector.shape_cast %148 : vector<1x8x8xf32> to vector<8x8xf32>
    %cst_68 = arith.constant dense<0.000000e+00> : vector<8x256xf32>
    %150 = tpu.matmul %149, %147, %cst_68 {dimension_numbers = #tpu.dot_dimension_numbers<[1], [0], [0], [1], [0, 0, 1, 1], [], []>} : vector<8x8xf32>, vector<8x256xf32>, vector<8x256xf32> -> vector<8x256xf32>
    %151 = arith.addf %144, %150 : vector<8x256xf32>
    %c241_i32_69 = arith.constant 241 : i32
    %152 = tpu.dynamic_rotate %113 by %c241_i32_69 dim 1 : vector<8x256xf32>, i32 -> vector<8x256xf32>
    %153 = vector.broadcast %27 : vector<1x256xf32> to vector<8x256xf32>
    %154 = arith.mulf %152, %153 : vector<8x256xf32>
    %c6_70 = arith.constant 6 : index
    %c0_71 = arith.constant 0 : index
    %c0_72 = arith.constant 0 : index
    %155 = vector.load %arg3[%c6_70, %c0_71, %c0_72] : memref<9x8x8xf32, #tpu.memory_space<vmem>>, vector<1x8x8xf32>
    %156 = vector.shape_cast %155 : vector<1x8x8xf32> to vector<8x8xf32>
    %cst_73 = arith.constant dense<0.000000e+00> : vector<8x256xf32>
    %157 = tpu.matmul %156, %154, %cst_73 {dimension_numbers = #tpu.dot_dimension_numbers<[1], [0], [0], [1], [0, 0, 1, 1], [], []>} : vector<8x8xf32>, vector<8x256xf32>, vector<8x256xf32> -> vector<8x256xf32>
    %158 = arith.addf %151, %157 : vector<8x256xf32>
    %c240_i32_74 = arith.constant 240 : i32
    %159 = tpu.dynamic_rotate %113 by %c240_i32_74 dim 1 : vector<8x256xf32>, i32 -> vector<8x256xf32>
    %160 = vector.broadcast %29 : vector<1x256xf32> to vector<8x256xf32>
    %161 = arith.mulf %159, %160 : vector<8x256xf32>
    %c7_75 = arith.constant 7 : index
    %c0_76 = arith.constant 0 : index
    %c0_77 = arith.constant 0 : index
    %162 = vector.load %arg3[%c7_75, %c0_76, %c0_77] : memref<9x8x8xf32, #tpu.memory_space<vmem>>, vector<1x8x8xf32>
    %163 = vector.shape_cast %162 : vector<1x8x8xf32> to vector<8x8xf32>
    %cst_78 = arith.constant dense<0.000000e+00> : vector<8x256xf32>
    %164 = tpu.matmul %163, %161, %cst_78 {dimension_numbers = #tpu.dot_dimension_numbers<[1], [0], [0], [1], [0, 0, 1, 1], [], []>} : vector<8x8xf32>, vector<8x256xf32>, vector<8x256xf32> -> vector<8x256xf32>
    %165 = arith.addf %158, %164 : vector<8x256xf32>
    %c239_i32_79 = arith.constant 239 : i32
    %166 = tpu.dynamic_rotate %113 by %c239_i32_79 dim 1 : vector<8x256xf32>, i32 -> vector<8x256xf32>
    %167 = vector.broadcast %32 : vector<1x256xf32> to vector<8x256xf32>
    %168 = arith.mulf %166, %167 : vector<8x256xf32>
    %c8_80 = arith.constant 8 : index
    %c0_81 = arith.constant 0 : index
    %c0_82 = arith.constant 0 : index
    %169 = vector.load %arg3[%c8_80, %c0_81, %c0_82] : memref<9x8x8xf32, #tpu.memory_space<vmem>>, vector<1x8x8xf32>
    %170 = vector.shape_cast %169 : vector<1x8x8xf32> to vector<8x8xf32>
    %cst_83 = arith.constant dense<0.000000e+00> : vector<8x256xf32>
    %171 = tpu.matmul %170, %168, %cst_83 {dimension_numbers = #tpu.dot_dimension_numbers<[1], [0], [0], [1], [0, 0, 1, 1], [], []>} : vector<8x8xf32>, vector<8x256xf32>, vector<8x256xf32> -> vector<8x256xf32>
    %172 = arith.addf %165, %171 : vector<8x256xf32>
    %cst_84 = arith.constant dense<0.000000e+00> : vector<8xf32>
    %173 = vector.multi_reduction <add>, %172, %cst_84 [1] : vector<8x256xf32> to vector<8xf32>
    %174 = vector.shape_cast %173 : vector<8xf32> to vector<8x1xf32>
    %175 = arith.mulf %172, %172 : vector<8x256xf32>
    %cst_85 = arith.constant dense<0.000000e+00> : vector<8xf32>
    %176 = vector.multi_reduction <add>, %175, %cst_85 [1] : vector<8x256xf32> to vector<8xf32>
    %177 = vector.shape_cast %176 : vector<8xf32> to vector<8x1xf32>
    %cst_86 = arith.constant 3.906250e-03 : f32
    %178 = vector.broadcast %cst_86 : f32 to vector<8x1xf32>
    %179 = arith.mulf %174, %178 : vector<8x1xf32>
    %cst_87 = arith.constant 3.906250e-03 : f32
    %180 = vector.broadcast %cst_87 : f32 to vector<8x1xf32>
    %181 = arith.mulf %177, %180 : vector<8x1xf32>
    %182 = arith.mulf %179, %179 : vector<8x1xf32>
    %183 = arith.subf %181, %182 : vector<8x1xf32>
    %cst_88 = arith.constant 0.000000e+00 : f32
    %184 = vector.broadcast %cst_88 : f32 to vector<8x1xf32>
    %185 = arith.maximumf %183, %184 : vector<8x1xf32>
    %186 = vector.broadcast %179 : vector<8x1xf32> to vector<8x256xf32>
    %187 = arith.subf %172, %186 : vector<8x256xf32>
    %cst_89 = arith.constant 9.99999974E-6 : f32
    %188 = vector.broadcast %cst_89 : f32 to vector<8x1xf32>
    %189 = arith.addf %185, %188 : vector<8x1xf32>
    %190 = math.rsqrt %189 : vector<8x1xf32>
    %191 = vector.broadcast %190 : vector<8x1xf32> to vector<8x256xf32>
    %192 = arith.mulf %187, %191 : vector<8x256xf32>
    %cst_90 = arith.constant 0.000000e+00 : f32
    %193 = vector.broadcast %cst_90 : f32 to vector<8x256xf32>
    %194 = arith.maximumf %192, %193 : vector<8x256xf32>
    %195 = arith.addf %1, %194 : vector<8x256xf32>
    %c0_91 = arith.constant 0 : index
    %c0_92 = arith.constant 0 : index
    %c0_93 = arith.constant 0 : index
    %196 = vector.load %arg4[%c0_91, %c0_92, %c0_93] : memref<1x8x256xf32, #tpu.memory_space<vmem>>, vector<1x8x256xf32>
    %197 = vector.shape_cast %196 : vector<1x8x256xf32> to vector<8x256xf32>
    %198 = vector.shape_cast %195 : vector<8x256xf32> to vector<1x8x256xf32>
    tpu.vector_store %arg4[%c0_91, %c0_92, %c0_93], %198 {strides = array<i32>} : memref<1x8x256xf32, #tpu.memory_space<vmem>>, vector<1x8x256xf32>,
    return
  }
  func.func @transform_0(%arg0: i32) -> (i32, i32, i32) {
    %c0_i32 = arith.constant 0 : i32
    %c0_i32_0 = arith.constant 0 : i32
    %c0_i32_1 = arith.constant 0 : i32
    return %arg0, %c0_i32, %c0_i32_0 : i32, i32, i32
  }
  func.func @transform_1(%arg0: i32) -> (i32, i32, i32) {
    %c0_i32 = arith.constant 0 : i32
    %c0_i32_0 = arith.constant 0 : i32
    %c0_i32_1 = arith.constant 0 : i32
    %c0_i32_2 = arith.constant 0 : i32
    return %c0_i32, %c0_i32_0, %c0_i32_1 : i32, i32, i32
  }
  func.func @transform_2(%arg0: i32) -> (i32, i32, i32) {
    %c0_i32 = arith.constant 0 : i32
    %c0_i32_0 = arith.constant 0 : i32
    %c0_i32_1 = arith.constant 0 : i32
    %c0_i32_2 = arith.constant 0 : i32
    return %c0_i32, %c0_i32_0, %c0_i32_1 : i32, i32, i32
  }
  func.func @transform_3(%arg0: i32) -> (i32, i32, i32) {
    %c0_i32 = arith.constant 0 : i32
    %c0_i32_0 = arith.constant 0 : i32
    %c0_i32_1 = arith.constant 0 : i32
    return %arg0, %c0_i32, %c0_i32_0 : i32, i32, i32
  }
}

</mosaic_0001>

<llo_original>
// kernel: tpu_custom_call.1
$region0: #{tpu_custom_call.1}
  #allocation0 [shape = 'u32[]', space=smem, size = 0x4, offset = 0x4, fixed_abs, tag = 'smem constant byte address 0x4 - core index']
  #allocation1 [shape = 'u32[144,128]{1,0:T(1,128)}', space=vmem, size = 0x12000, scoped, tag = 'internal scratch']
  %s0 = inlined_call_operand.vmem [shape: f32[1,8,256], index: 0, kind: input, shape index: {}]
  %s1 = inlined_call_operand.vmem [shape: f32[9,8,8], index: 1, kind: input, shape index: {}]
  %s2 = inlined_call_operand.vmem [shape: f32[9,8,8], index: 2, kind: input, shape index: {}]
  %s3 = inlined_call_operand.hbm [shape: f32[1,8,256], index: 3, kind: output, shape index: {}]
  %s4 = sld [smem:[#allocation0]]
  $region22: #{tpu_custom_call.1} parent=0
    _
  %s6 = ssub.s32 1, %s4
  %s7 = scalar_select 0, %s6, %s4
  $region1: #{tpu_custom_call.1} parent=0
    #allocation2 [shape = 'u8[8192]{0}', space=vmem, size = 0x2000, scoped, tag = 'output window, operand 0, single buffered']
    #allocation3 [shape = 's32[1]{0}', space=sflag, size = 0x4, scoped, tag = 'scoped memory for tpu_custom_call.1']
    %8 = vsyncpa [#allocation3], 0
    // Predicated region
    $region2: #{tpu_custom_call.1} parent=1 // pred_check
      _
    $region3: #{tpu_custom_call.1} parent=1 // pred_check_branch
      %10 = sbr.rel (0) target = $region5
    $region4: #{tpu_custom_call.1} parent=1 // pred_region
      _
    $region5: #{tpu_custom_call.1} parent=1 // pred_fallthru
      _
    // Predicated region
    $region6: #{tpu_custom_call.1} parent=1 // pred_check
      _
    $region7: #{tpu_custom_call.1} parent=1 // pred_check_branch
      %12 = sbr.rel (0) target = $region9
    $region8: #{tpu_custom_call.1} parent=1 // pred_region
      _
    $region9: #{tpu_custom_call.1} parent=1 // pred_fallthru
      _
    // Predicated region
    $region10: #{tpu_custom_call.1} parent=1 // pred_check
      _
    $region11: #{tpu_custom_call.1} parent=1 // pred_check_branch
      %14 = sbr.rel (0) target = $region13
    $region12: #{tpu_custom_call.1} parent=1 // pred_region
      _
    $region13: #{tpu_custom_call.1} parent=1 // pred_fallthru
      _
    %v15 = vld [vmem:[%s0] sm:$0xff]
    %v16 = vld [vmem:[%s0 + $0x8] sm:$0xff]
    %v17 = vlaneseq
    %v18 = vand.u32 %v17, 127
    %v19 = vadd.s32 %v18, 128
    %v20 = vand.u32 %v18, 15
    %v21 = vand.u32 %v19, 15
    %vm22 = vcmp.ge.s32.totalorder %v18, 16
    %vm23 = vcmp.ge.s32.totalorder %v19, 16
    %vm24 = vcmp.lt.s32.totalorder %v18, 240
    %vm25 = vcmp.lt.s32.totalorder %v19, 240
    %vm26 = vcmp.ge.s32.totalorder %v20, 1
    %vm27 = vcmp.ge.s32.totalorder %v21, 1
    %vm28 = vcmp.le.s32.totalorder %v20, 14
    %vm29 = vcmp.le.s32.totalorder %v21, 14
    %vm30 = vmand %vm22, %vm26
    %vm31 = vmand %vm23, %vm27
    %v32 = vsel %vm30, 1, 0
    %v33 = vsel %vm31, 1, 0
    %v34 = vcvt.s32.f32 %v32
    %v35 = vcvt.s32.f32 %v33
    %v36 = vsel %vm22, 1, 0
    %v37 = vsel %vm23, 1, 0
    %v38 = vcvt.s32.f32 %v36
    %v39 = vcvt.s32.f32 %v37
    %vm40 = vmand %vm22, %vm28
    %vm41 = vmand %vm23, %vm29
    %v42 = vsel %vm40, 1, 0
    %v43 = vsel %vm41, 1, 0
    %v44 = vcvt.s32.f32 %v42
    %v45 = vcvt.s32.f32 %v43
    %v46 = vsel %vm26, 1, 0
    %v47 = vsel %vm27, 1, 0
    %v48 = vcvt.s32.f32 %v46
    %v49 = vcvt.s32.f32 %v47
    %v50 = vsel %vm28, 1, 0
    %v51 = vsel %vm29, 1, 0
    %v52 = vcvt.s32.f32 %v50
    %v53 = vcvt.s32.f32 %v51
    %vm54 = vmand %vm24, %vm26
    %vm55 = vmand %vm25, %vm27
    %v56 = vsel %vm54, 1, 0
    %v57 = vsel %vm55, 1, 0
    %v58 = vcvt.s32.f32 %v56
    %v59 = vcvt.s32.f32 %v57
    %v60 = vsel %vm24, 1, 0
    %v61 = vsel %vm25, 1, 0
    %v62 = vcvt.s32.f32 %v60
    %v63 = vcvt.s32.f32 %v61
    %vm64 = vmand %vm24, %vm28
    %vm65 = vmand %vm25, %vm29
    %v66 = vsel %vm64, 1, 0
    %v67 = vsel %vm65, 1, 0
    %v68 = vcvt.s32.f32 %v66
    %v69 = vcvt.s32.f32 %v67
    %s70 = scalar_lea.vmem %s1, 32
    %v71 = vld [vmem:[%s70] sm:$0xff]
    %72 = vrot.lane.b32.xlu0 %v15, 17
    %v73 = vpop.permute.xlu0 %72
    %74 = vrot.lane.b32.xlu0 %v16, 17
    %v75 = vpop.permute.xlu0 %74
    %vm76 = vcmp.lt.s32.totalorder %v18, 17
    %v77 = vsel %vm76, %v73, %v75
    %v78 = vsel %vm76, %v75, %v73
    %v79 = vmul.f32 %v78, %v34
    %v80 = vmul.f32 %v77, %v35
    %v81 = vld [vmem:[%s1] sm:$0xff]
    %vm82 = vcmask 64512
    %v84 = vsel %vm82, %v81, 0
    %86 = vmatprep.subr.mxu0 %v80
    %87 = vmatpush1.msra.mxu0 %v79
    %88 = vmatprep.subr.mxu0 0.0
    %89 = vmatpush1.msra.mxu0 0.0
    %90 = vmatprep.subr.mxu0 0.0
    %91 = vmatpush1.msra.mxu0 0.0
    %92 = vmatprep.subr.mxu0 0.0
    %93 = vmatpush1.msra.mxu0 0.0
    %94 = vmatprep.subr.mxu0 0.0
    %95 = vmatpush1.msra.mxu0 0.0
    %96 = vmatprep.subr.mxu0 0.0
    %97 = vmatpush1.msra.mxu0 0.0
    %98 = vmatprep.subr.mxu0 0.0
    %99 = vmatpush1.msra.mxu0 0.0
    %100 = vmatprep.subr.mxu0 0.0
    %101 = vmatpush1.msra.mxu0 0.0
    %102 = vmatprep.subr.mxu0 0.0
    %103 = vmatpush1.msra.mxu0 0.0
    %104 = vmatprep.subr.mxu0 0.0
    %105 = vmatpush1.msra.mxu0 0.0
    %106 = vmatprep.subr.mxu0 0.0
    %107 = vmatpush1.msra.mxu0 0.0
    %108 = vmatprep.subr.mxu0 0.0
    %109 = vmatpush1.msra.mxu0 0.0
    %110 = vmatprep.subr.mxu0 0.0
    %111 = vmatpush1.msra.mxu0 0.0
    %112 = vmatprep.subr.mxu0 0.0
    %113 = vmatpush1.msra.mxu0 0.0
    %114 = vmatprep.subr.mxu0 0.0
    %115 = vmatpush1.msra.mxu0 0.0
    %116 = vmatprep.subr.mxu0 0.0
    %117 = vmatpush1.msra.mxu0 0.0
    %118 = vmatprep.subr.mxu0 0.0
    %119 = vmatpush1.msra.mxu0 0.0
    %120 = vmatprep.subr.mxu0 0.0
    %121 = vmatpush1.msra.mxu0 0.0
    %122 = vmatprep.subr.mxu0 0.0
    %123 = vmatpush1.msra.mxu0 0.0
    %124 = vmatprep.subr.mxu0 0.0
    %125 = vmatpush1.msra.mxu0 0.0
    %126 = vmatprep.subr.mxu0 0.0
    %127 = vmatpush1.msra.mxu0 0.0
    %128 = vmatprep.subr.mxu0 0.0
    %129 = vmatpush1.msra.mxu0 0.0
    %130 = vmatprep.subr.mxu0 0.0
    %131 = vmatpush1.msra.mxu0 0.0
    %132 = vmatprep.subr.mxu0 0.0
    %133 = vmatpush1.msra.mxu0 0.0
    %134 = vmatprep.subr.mxu0 0.0
    %135 = vmatpush1.msra.mxu0 0.0
    %136 = vmatprep.subr.mxu0 0.0
    %137 = vmatpush1.msra.mxu0 0.0
    %138 = vmatprep.subr.mxu0 0.0
    %139 = vmatpush1.msra.mxu0 0.0
    %140 = vmatprep.subr.mxu0 0.0
    %141 = vmatpush1.msra.mxu0 0.0
    %142 = vmatprep.subr.mxu0 0.0
    %143 = vmatpush1.msra.mxu0 0.0
    %144 = vmatprep.subr.mxu0 0.0
    %145 = vmatpush1.msra.mxu0 0.0
    %146 = vmatprep.subr.mxu0 0.0
    %147 = vmatpush1.msra.mxu0 0.0
    %148 = vmatprep.subr.mxu0 0.0
    %149 = vmatpush1.msra.mxu0 0.0
    %150 = vmatprep.mubr.f32.mxu0 0.0
    %151 = vmatmul.mubr.f32.gmra.mrb[0].mxu0 %v84
    %v152 = vpop.f32.mrb[0].mxu0
    %v153 = vadd.f32 0.0, %v152
    %v154 = vpop.f32.mrb[0].mxu0
    %v155 = vadd.f32 0.0, %v154
    %156 = vdwg.mxu0
    %v158 = vsel %vm82, %v71, 0
    %160 = vmatprep.subr.mxu0 %v16
    %161 = vmatpush1.msra.mxu0 %v15
    %162 = vmatprep.subr.mxu0 0.0
    %163 = vmatpush1.msra.mxu0 0.0
    %164 = vmatprep.subr.mxu0 0.0
    %165 = vmatpush1.msra.mxu0 0.0
    %166 = vmatprep.subr.mxu0 0.0
    %167 = vmatpush1.msra.mxu0 0.0
    %168 = vmatprep.subr.mxu0 0.0
    %169 = vmatpush1.msra.mxu0 0.0
    %170 = vmatprep.subr.mxu0 0.0
    %171 = vmatpush1.msra.mxu0 0.0
    %172 = vmatprep.subr.mxu0 0.0
    %173 = vmatpush1.msra.mxu0 0.0
    %174 = vmatprep.subr.mxu0 0.0
    %175 = vmatpush1.msra.mxu0 0.0
    %176 = vmatprep.subr.mxu0 0.0
    %177 = vmatpush1.msra.mxu0 0.0
    %178 = vmatprep.subr.mxu0 0.0
    %179 = vmatpush1.msra.mxu0 0.0
    %180 = vmatprep.subr.mxu0 0.0
    %181 = vmatpush1.msra.mxu0 0.0
    %182 = vmatprep.subr.mxu0 0.0
    %183 = vmatpush1.msra.mxu0 0.0
    %184 = vmatprep.subr.mxu0 0.0
    %185 = vmatpush1.msra.mxu0 0.0
    %186 = vmatprep.subr.mxu0 0.0
    %187 = vmatpush1.msra.mxu0 0.0
    %188 = vmatprep.subr.mxu0 0.0
    %189 = vmatpush1.msra.mxu0 0.0
    %190 = vmatprep.subr.mxu0 0.0
    %191 = vmatpush1.msra.mxu0 0.0
    %192 = vmatprep.subr.mxu0 0.0
    %193 = vmatpush1.msra.mxu0 0.0
    %194 = vmatprep.subr.mxu0 0.0
    %195 = vmatpush1.msra.mxu0 0.0
    %196 = vmatprep.subr.mxu0 0.0
    %197 = vmatpush1.msra.mxu0 0.0
    %198 = vmatprep.subr.mxu0 0.0
    %199 = vmatpush1.msra.mxu0 0.0
    %200 = vmatprep.subr.mxu0 0.0
    %201 = vmatpush1.msra.mxu0 0.0
    %202 = vmatprep.subr.mxu0 0.0
    %203 = vmatpush1.msra.mxu0 0.0
    %204 = vmatprep.subr.mxu0 0.0
    %205 = vmatpush1.msra.mxu0 0.0
    %206 = vmatprep.subr.mxu0 0.0
    %207 = vmatpush1.msra.mxu0 0.0
    %208 = vmatprep.subr.mxu0 0.0
    %209 = vmatpush1.msra.mxu0 0.0
    %210 = vmatprep.subr.mxu0 0.0
    %211 = vmatpush1.msra.mxu0 0.0
    %212 = vmatprep.subr.mxu0 0.0
    %213 = vmatpush1.msra.mxu0 0.0
    %214 = vmatprep.subr.mxu0 0.0
    %215 = vmatpush1.msra.mxu0 0.0
    %216 = vmatprep.subr.mxu0 0.0
    %217 = vmatpush1.msra.mxu0 0.0
    %218 = vmatprep.subr.mxu0 0.0
    %219 = vmatpush1.msra.mxu0 0.0
    %220 = vmatprep.subr.mxu0 0.0
    %221 = vmatpush1.msra.mxu0 0.0
    %222 = vmatprep.subr.mxu0 0.0
    %223 = vmatpush1.msra.mxu0 0.0
    %224 = vmatprep.mubr.f32.mxu0 0.0
    %225 = vmatmul.mubr.f32.gmra.mrb[0].mxu0 %v158
    %v226 = vpop.f32.mrb[0].mxu0
    %v227 = vadd.f32 %v153, %v226
    %v228 = vpop.f32.mrb[0].mxu0
    %v229 = vadd.f32 %v155, %v228
    %230 = vdwg.mxu0
    %231 = vrot.lane.b32.xlu0 %v15, 16
    %v232 = vpop.permute.xlu0 %231
    %233 = vrot.lane.b32.xlu0 %v16, 16
    %v234 = vpop.permute.xlu0 %233
    %vm235 = vcmp.lt.s32.totalorder %v18, 16
    %v236 = vsel %vm235, %v232, %v234
    %v237 = vsel %vm235, %v234, %v232
    %v238 = vmul.f32 %v237, %v38
    %v239 = vmul.f32 %v236, %v39
    %s240 = scalar_lea.vmem %s1, 8
    %v241 = vld [vmem:[%s240] sm:$0xff]
    %v243 = vsel %vm82, %v241, 0
    %245 = vmatprep.subr.mxu0 %v239
    %246 = vmatpush1.msra.mxu0 %v238
    %247 = vmatprep.subr.mxu0 0.0
    %248 = vmatpush1.msra.mxu0 0.0
    %249 = vmatprep.subr.mxu0 0.0
    %250 = vmatpush1.msra.mxu0 0.0
    %251 = vmatprep.subr.mxu0 0.0
    %252 = vmatpush1.msra.mxu0 0.0
    %253 = vmatprep.subr.mxu0 0.0
    %254 = vmatpush1.msra.mxu0 0.0
    %255 = vmatprep.subr.mxu0 0.0
    %256 = vmatpush1.msra.mxu0 0.0
    %257 = vmatprep.subr.mxu0 0.0
    %258 = vmatpush1.msra.mxu0 0.0
    %259 = vmatprep.subr.mxu0 0.0
    %260 = vmatpush1.msra.mxu0 0.0
    %261 = vmatprep.subr.mxu0 0.0
    %262 = vmatpush1.msra.mxu0 0.0
    %263 = vmatprep.subr.mxu0 0.0
    %264 = vmatpush1.msra.mxu0 0.0
    %265 = vmatprep.subr.mxu0 0.0
    %266 = vmatpush1.msra.mxu0 0.0
    %267 = vmatprep.subr.mxu0 0.0
    %268 = vmatpush1.msra.mxu0 0.0
    %269 = vmatprep.subr.mxu0 0.0
    %270 = vmatpush1.msra.mxu0 0.0
    %271 = vmatprep.subr.mxu0 0.0
    %272 = vmatpush1.msra.mxu0 0.0
    %273 = vmatprep.subr.mxu0 0.0
    %274 = vmatpush1.msra.mxu0 0.0
    %275 = vmatprep.subr.mxu0 0.0
    %276 = vmatpush1.msra.mxu0 0.0
    %277 = vmatprep.subr.mxu0 0.0
    %278 = vmatpush1.msra.mxu0 0.0
    %279 = vmatprep.subr.mxu0 0.0
    %280 = vmatpush1.msra.mxu0 0.0
    %281 = vmatprep.subr.mxu0 0.0
    %282 = vmatpush1.msra.mxu0 0.0
    %283 = vmatprep.subr.mxu0 0.0
    %284 = vmatpush1.msra.mxu0 0.0
    %285 = vmatprep.subr.mxu0 0.0
    %286 = vmatpush1.msra.mxu0 0.0
    %287 = vmatprep.subr.mxu0 0.0
    %288 = vmatpush1.msra.mxu0 0.0
    %289 = vmatprep.subr.mxu0 0.0
    %290 = vmatpush1.msra.mxu0 0.0
    %291 = vmatprep.subr.mxu0 0.0
    %292 = vmatpush1.msra.mxu0 0.0
    %293 = vmatprep.subr.mxu0 0.0
    %294 = vmatpush1.msra.mxu0 0.0
    %295 = vmatprep.subr.mxu0 0.0
    %296 = vmatpush1.msra.mxu0 0.0
    %297 = vmatprep.subr.mxu0 0.0
    %298 = vmatpush1.msra.mxu0 0.0
    %299 = vmatprep.subr.mxu0 0.0
    %300 = vmatpush1.msra.mxu0 0.0
    %301 = vmatprep.subr.mxu0 0.0
    %302 = vmatpush1.msra.mxu0 0.0
    %303 = vmatprep.subr.mxu0 0.0
    %304 = vmatpush1.msra.mxu0 0.0
    %305 = vmatprep.subr.mxu0 0.0
    %306 = vmatpush1.msra.mxu0 0.0
    %307 = vmatprep.subr.mxu0 0.0
    %308 = vmatpush1.msra.mxu0 0.0
    %309 = vmatprep.mubr.f32.mxu0 0.0
    %310 = vmatmul.mubr.f32.gmra.mrb[0].mxu0 %v243
    %v311 = vpop.f32.mrb[0].mxu0
    %v312 = vadd.f32 0.0, %v311
    %v313 = vpop.f32.mrb[0].mxu0
    %v314 = vadd.f32 0.0, %v313
    %315 = vdwg.mxu0
    %v316 = vadd.f32 %v227, %v312
    %v317 = vadd.f32 %v229, %v314
    %318 = vrot.lane.b32.xlu0 %v15, 15
    %v319 = vpop.permute.xlu0 %318
    %320 = vrot.lane.b32.xlu0 %v16, 15
    %v321 = vpop.permute.xlu0 %320
    %vm322 = vcmp.lt.s32.totalorder %v18, 15
    %v323 = vsel %vm322, %v319, %v321
    %v324 = vsel %vm322, %v321, %v319
    %v325 = vmul.f32 %v324, %v44
    %v326 = vmul.f32 %v323, %v45
    %s327 = scalar_lea.vmem %s1, 16
    %v328 = vld [vmem:[%s327] sm:$0xff]
    %v330 = vsel %vm82, %v328, 0
    %332 = vmatprep.subr.mxu0 %v326
    %333 = vmatpush1.msra.mxu0 %v325
    %334 = vmatprep.subr.mxu0 0.0
    %335 = vmatpush1.msra.mxu0 0.0
    %336 = vmatprep.subr.mxu0 0.0
    %337 = vmatpush1.msra.mxu0 0.0
    %338 = vmatprep.subr.mxu0 0.0
    %339 = vmatpush1.msra.mxu0 0.0
    %340 = vmatprep.subr.mxu0 0.0
    %341 = vmatpush1.msra.mxu0 0.0
    %342 = vmatprep.subr.mxu0 0.0
    %343 = vmatpush1.msra.mxu0 0.0
    %344 = vmatprep.subr.mxu0 0.0
    %345 = vmatpush1.msra.mxu0 0.0
    %346 = vmatprep.subr.mxu0 0.0
    %347 = vmatpush1.msra.mxu0 0.0
    %348 = vmatprep.subr.mxu0 0.0
    %349 = vmatpush1.msra.mxu0 0.0
    %350 = vmatprep.subr.mxu0 0.0
    %351 = vmatpush1.msra.mxu0 0.0
    %352 = vmatprep.subr.mxu0 0.0
    %353 = vmatpush1.msra.mxu0 0.0
    %354 = vmatprep.subr.mxu0 0.0
    %355 = vmatpush1.msra.mxu0 0.0
    %356 = vmatprep.subr.mxu0 0.0
    %357 = vmatpush1.msra.mxu0 0.0
    %358 = vmatprep.subr.mxu0 0.0
    %359 = vmatpush1.msra.mxu0 0.0
    %360 = vmatprep.subr.mxu0 0.0
    %361 = vmatpush1.msra.mxu0 0.0
    %362 = vmatprep.subr.mxu0 0.0
    %363 = vmatpush1.msra.mxu0 0.0
    %364 = vmatprep.subr.mxu0 0.0
    %365 = vmatpush1.msra.mxu0 0.0
    %366 = vmatprep.subr.mxu0 0.0
    %367 = vmatpush1.msra.mxu0 0.0
    %368 = vmatprep.subr.mxu0 0.0
    %369 = vmatpush1.msra.mxu0 0.0
    %370 = vmatprep.subr.mxu0 0.0
    %371 = vmatpush1.msra.mxu0 0.0
    %372 = vmatprep.subr.mxu0 0.0
    %373 = vmatpush1.msra.mxu0 0.0
    %374 = vmatprep.subr.mxu0 0.0
    %375 = vmatpush1.msra.mxu0 0.0
    %376 = vmatprep.subr.mxu0 0.0
    %377 = vmatpush1.msra.mxu0 0.0
    %378 = vmatprep.subr.mxu0 0.0
    %379 = vmatpush1.msra.mxu0 0.0
    %380 = vmatprep.subr.mxu0 0.0
    %381 = vmatpush1.msra.mxu0 0.0
    %382 = vmatprep.subr.mxu0 0.0
    %383 = vmatpush1.msra.mxu0 0.0
    %384 = vmatprep.subr.mxu0 0.0
    %385 = vmatpush1.msra.mxu0 0.0
    %386 = vmatprep.subr.mxu0 0.0
    %387 = vmatpush1.msra.mxu0 0.0
    %388 = vmatprep.subr.mxu0 0.0
    %389 = vmatpush1.msra.mxu0 0.0
    %390 = vmatprep.subr.mxu0 0.0
    %391 = vmatpush1.msra.mxu0 0.0
    %392 = vmatprep.subr.mxu0 0.0
    %393 = vmatpush1.msra.mxu0 0.0
    %394 = vmatprep.subr.mxu0 0.0
    %395 = vmatpush1.msra.mxu0 0.0
    %396 = vmatprep.mubr.f32.mxu0 0.0
    %397 = vmatmul.mubr.f32.gmra.mrb[0].mxu0 %v330
    %v398 = vpop.f32.mrb[0].mxu0
    %v399 = vadd.f32 0.0, %v398
    %v400 = vpop.f32.mrb[0].mxu0
    %v401 = vadd.f32 0.0, %v400
    %402 = vdwg.mxu0
    %v403 = vadd.f32 %v316, %v399
    %v404 = vadd.f32 %v317, %v401
    %405 = vrot.lane.b32.xlu0 %v15, 1
    %v406 = vpop.permute.xlu0 %405
    %407 = vrot.lane.b32.xlu0 %v16, 1
    %v408 = vpop.permute.xlu0 %407
    %vm409 = vcmp.lt.s32.totalorder %v18, 1
    %v410 = vsel %vm409, %v406, %v408
    %v411 = vsel %vm409, %v408, %v406
    %v412 = vmul.f32 %v411, %v48
    %v413 = vmul.f32 %v410, %v49
    %s414 = scalar_lea.vmem %s1, 24
    %v415 = vld [vmem:[%s414] sm:$0xff]
    %v417 = vsel %vm82, %v415, 0
    %419 = vmatprep.subr.mxu0 %v413
    %420 = vmatpush1.msra.mxu0 %v412
    %421 = vmatprep.subr.mxu0 0.0
    %422 = vmatpush1.msra.mxu0 0.0
    %423 = vmatprep.subr.mxu0 0.0
    %424 = vmatpush1.msra.mxu0 0.0
    %425 = vmatprep.subr.mxu0 0.0
    %426 = vmatpush1.msra.mxu0 0.0
    %427 = vmatprep.subr.mxu0 0.0
    %428 = vmatpush1.msra.mxu0 0.0
    %429 = vmatprep.subr.mxu0 0.0
    %430 = vmatpush1.msra.mxu0 0.0
    %431 = vmatprep.subr.mxu0 0.0
    %432 = vmatpush1.msra.mxu0 0.0
    %433 = vmatprep.subr.mxu0 0.0
    %434 = vmatpush1.msra.mxu0 0.0
    %435 = vmatprep.subr.mxu0 0.0
    %436 = vmatpush1.msra.mxu0 0.0
    %437 = vmatprep.subr.mxu0 0.0
    %438 = vmatpush1.msra.mxu0 0.0
    %439 = vmatprep.subr.mxu0 0.0
    %440 = vmatpush1.msra.mxu0 0.0
    %441 = vmatprep.subr.mxu0 0.0
    %442 = vmatpush1.msra.mxu0 0.0
    %443 = vmatprep.subr.mxu0 0.0
    %444 = vmatpush1.msra.mxu0 0.0
    %445 = vmatprep.subr.mxu0 0.0
    %446 = vmatpush1.msra.mxu0 0.0
    %447 = vmatprep.subr.mxu0 0.0
    %448 = vmatpush1.msra.mxu0 0.0
    %449 = vmatprep.subr.mxu0 0.0
    %450 = vmatpush1.msra.mxu0 0.0
    %451 = vmatprep.subr.mxu0 0.0
    %452 = vmatpush1.msra.mxu0 0.0
    %453 = vmatprep.subr.mxu0 0.0
    %454 = vmatpush1.msra.mxu0 0.0
    %455 = vmatprep.subr.mxu0 0.0
    %456 = vmatpush1.msra.mxu0 0.0
    %457 = vmatprep.subr.mxu0 0.0
    %458 = vmatpush1.msra.mxu0 0.0
    %459 = vmatprep.subr.mxu0 0.0
    %460 = vmatpush1.msra.mxu0 0.0
    %461 = vmatprep.subr.mxu0 0.0
    %462 = vmatpush1.msra.mxu0 0.0
    %463 = vmatprep.subr.mxu0 0.0
    %464 = vmatpush1.msra.mxu0 0.0
    %465 = vmatprep.subr.mxu0 0.0
    %466 = vmatpush1.msra.mxu0 0.0
    %467 = vmatprep.subr.mxu0 0.0
    %468 = vmatpush1.msra.mxu0 0.0
    %469 = vmatprep.subr.mxu0 0.0
    %470 = vmatpush1.msra.mxu0 0.0
    %471 = vmatprep.subr.mxu0 0.0
    %472 = vmatpush1.msra.mxu0 0.0
    %473 = vmatprep.subr.mxu0 0.0
    %474 = vmatpush1.msra.mxu0 0.0
    %475 = vmatprep.subr.mxu0 0.0
    %476 = vmatpush1.msra.mxu0 0.0
    %477 = vmatprep.subr.mxu0 0.0
    %478 = vmatpush1.msra.mxu0 0.0
    %479 = vmatprep.subr.mxu0 0.0
    %480 = vmatpush1.msra.mxu0 0.0
    %481 = vmatprep.subr.mxu0 0.0
    %482 = vmatpush1.msra.mxu0 0.0
    %483 = vmatprep.mubr.f32.mxu0 0.0
    %484 = vmatmul.mubr.f32.gmra.mrb[0].mxu0 %v417
    %v485 = vpop.f32.mrb[0].mxu0
    %v486 = vadd.f32 0.0, %v485
    %v487 = vpop.f32.mrb[0].mxu0
    %v488 = vadd.f32 0.0, %v487
    %489 = vdwg.mxu0
    %v490 = vadd.f32 %v403, %v486
    %v491 = vadd.f32 %v404, %v488
    %492 = vrot.lane.b32.xlu0 %v15, 127
    %v493 = vpop.permute.xlu0 %492
    %494 = vrot.lane.b32.xlu0 %v16, 127
    %v495 = vpop.permute.xlu0 %494
    %vm496 = vcmp.lt.s32.totalorder %v18, 127
    %v497 = vsel %vm496, %v493, %v495
    %v498 = vsel %vm496, %v495, %v493
    %v499 = vmul.f32 %v497, %v52
    %v500 = vmul.f32 %v498, %v53
    %s501 = scalar_lea.vmem %s1, 40
    %v502 = vld [vmem:[%s501] sm:$0xff]
    %v504 = vsel %vm82, %v502, 0
    %506 = vmatprep.subr.mxu0 %v500
    %507 = vmatpush1.msra.mxu0 %v499
    %508 = vmatprep.subr.mxu0 0.0
    %509 = vmatpush1.msra.mxu0 0.0
    %510 = vmatprep.subr.mxu0 0.0
    %511 = vmatpush1.msra.mxu0 0.0
    %512 = vmatprep.subr.mxu0 0.0
    %513 = vmatpush1.msra.mxu0 0.0
    %514 = vmatprep.subr.mxu0 0.0
    %515 = vmatpush1.msra.mxu0 0.0
    %516 = vmatprep.subr.mxu0 0.0
    %517 = vmatpush1.msra.mxu0 0.0
    %518 = vmatprep.subr.mxu0 0.0
    %519 = vmatpush1.msra.mxu0 0.0
    %520 = vmatprep.subr.mxu0 0.0
    %521 = vmatpush1.msra.mxu0 0.0
    %522 = vmatprep.subr.mxu0 0.0
    %523 = vmatpush1.msra.mxu0 0.0
    %524 = vmatprep.subr.mxu0 0.0
    %525 = vmatpush1.msra.mxu0 0.0
    %526 = vmatprep.subr.mxu0 0.0
    %527 = vmatpush1.msra.mxu0 0.0
    %528 = vmatprep.subr.mxu0 0.0
    %529 = vmatpush1.msra.mxu0 0.0
    %530 = vmatprep.subr.mxu0 0.0
    %531 = vmatpush1.msra.mxu0 0.0
    %532 = vmatprep.subr.mxu0 0.0
    %533 = vmatpush1.msra.mxu0 0.0
    %534 = vmatprep.subr.mxu0 0.0
    %535 = vmatpush1.msra.mxu0 0.0
    %536 = vmatprep.subr.mxu0 0.0
    %537 = vmatpush1.msra.mxu0 0.0
    %538 = vmatprep.subr.mxu0 0.0
    %539 = vmatpush1.msra.mxu0 0.0
    %540 = vmatprep.subr.mxu0 0.0
    %541 = vmatpush1.msra.mxu0 0.0
    %542 = vmatprep.subr.mxu0 0.0
    %543 = vmatpush1.msra.mxu0 0.0
    %544 = vmatprep.subr.mxu0 0.0
    %545 = vmatpush1.msra.mxu0 0.0
    %546 = vmatprep.subr.mxu0 0.0
    %547 = vmatpush1.msra.mxu0 0.0
    %548 = vmatprep.subr.mxu0 0.0
    %549 = vmatpush1.msra.mxu0 0.0
    %550 = vmatprep.subr.mxu0 0.0
    %551 = vmatpush1.msra.mxu0 0.0
    %552 = vmatprep.subr.mxu0 0.0
    %553 = vmatpush1.msra.mxu0 0.0
    %554 = vmatprep.subr.mxu0 0.0
    %555 = vmatpush1.msra.mxu0 0.0
    %556 = vmatprep.subr.mxu0 0.0
    %557 = vmatpush1.msra.mxu0 0.0
    %558 = vmatprep.subr.mxu0 0.0
    %559 = vmatpush1.msra.mxu0 0.0
    %560 = vmatprep.subr.mxu0 0.0
    %561 = vmatpush1.msra.mxu0 0.0
    %562 = vmatprep.subr.mxu0 0.0
    %563 = vmatpush1.msra.mxu0 0.0
    %564 = vmatprep.subr.mxu0 0.0
    %565 = vmatpush1.msra.mxu0 0.0
    %566 = vmatprep.subr.mxu0 0.0
    %567 = vmatpush1.msra.mxu0 0.0
    %568 = vmatprep.subr.mxu0 0.0
    %569 = vmatpush1.msra.mxu0 0.0
    %570 = vmatprep.mubr.f32.mxu0 0.0
    %571 = vmatmul.mubr.f32.gmra.mrb[0].mxu0 %v504
    %v572 = vpop.f32.mrb[0].mxu0
    %v573 = vadd.f32 0.0, %v572
    %v574 = vpop.f32.mrb[0].mxu0
    %v575 = vadd.f32 0.0, %v574
    %576 = vdwg.mxu0
    %v577 = vadd.f32 %v490, %v573
    %v578 = vadd.f32 %v491, %v575
    %579 = vrot.lane.b32.xlu0 %v15, 113
    %v580 = vpop.permute.xlu0 %579
    %581 = vrot.lane.b32.xlu0 %v16, 113
    %v582 = vpop.permute.xlu0 %581
    %vm583 = vcmp.lt.s32.totalorder %v18, 113
    %v584 = vsel %vm583, %v580, %v582
    %v585 = vsel %vm583, %v582, %v580
    %v586 = vmul.f32 %v584, %v58
    %v587 = vmul.f32 %v585, %v59
    %s588 = scalar_lea.vmem %s1, 48
    %v589 = vld [vmem:[%s588] sm:$0xff]
    %v591 = vsel %vm82, %v589, 0
    %593 = vmatprep.subr.mxu0 %v587
    %594 = vmatpush1.msra.mxu0 %v586
    %595 = vmatprep.subr.mxu0 0.0
    %596 = vmatpush1.msra.mxu0 0.0
    %597 = vmatprep.subr.mxu0 0.0
    %598 = vmatpush1.msra.mxu0 0.0
    %599 = vmatprep.subr.mxu0 0.0
    %600 = vmatpush1.msra.mxu0 0.0
    %601 = vmatprep.subr.mxu0 0.0
    %602 = vmatpush1.msra.mxu0 0.0
    %603 = vmatprep.subr.mxu0 0.0
    %604 = vmatpush1.msra.mxu0 0.0
    %605 = vmatprep.subr.mxu0 0.0
    %606 = vmatpush1.msra.mxu0 0.0
    %607 = vmatprep.subr.mxu0 0.0
    %608 = vmatpush1.msra.mxu0 0.0
    %609 = vmatprep.subr.mxu0 0.0
    %610 = vmatpush1.msra.mxu0 0.0
    %611 = vmatprep.subr.mxu0 0.0
    %612 = vmatpush1.msra.mxu0 0.0
    %613 = vmatprep.subr.mxu0 0.0
    %614 = vmatpush1.msra.mxu0 0.0
    %615 = vmatprep.subr.mxu0 0.0
    %616 = vmatpush1.msra.mxu0 0.0
    %617 = vmatprep.subr.mxu0 0.0
    %618 = vmatpush1.msra.mxu0 0.0
    %619 = vmatprep.subr.mxu0 0.0
    %620 = vmatpush1.msra.mxu0 0.0
    %621 = vmatprep.subr.mxu0 0.0
    %622 = vmatpush1.msra.mxu0 0.0
    %623 = vmatprep.subr.mxu0 0.0
    %624 = vmatpush1.msra.mxu0 0.0
    %625 = vmatprep.subr.mxu0 0.0
    %626 = vmatpush1.msra.mxu0 0.0
    %627 = vmatprep.subr.mxu0 0.0
    %628 = vmatpush1.msra.mxu0 0.0
    %629 = vmatprep.subr.mxu0 0.0
    %630 = vmatpush1.msra.mxu0 0.0
    %631 = vmatprep.subr.mxu0 0.0
    %632 = vmatpush1.msra.mxu0 0.0
    %633 = vmatprep.subr.mxu0 0.0
    %634 = vmatpush1.msra.mxu0 0.0
    %635 = vmatprep.subr.mxu0 0.0
    %636 = vmatpush1.msra.mxu0 0.0
    %637 = vmatprep.subr.mxu0 0.0
    %638 = vmatpush1.msra.mxu0 0.0
    %639 = vmatprep.subr.mxu0 0.0
    %640 = vmatpush1.msra.mxu0 0.0
    %641 = vmatprep.subr.mxu0 0.0
    %642 = vmatpush1.msra.mxu0 0.0
    %643 = vmatprep.subr.mxu0 0.0
    %644 = vmatpush1.msra.mxu0 0.0
    %645 = vmatprep.subr.mxu0 0.0
    %646 = vmatpush1.msra.mxu0 0.0
    %647 = vmatprep.subr.mxu0 0.0
    %648 = vmatpush1.msra.mxu0 0.0
    %649 = vmatprep.subr.mxu0 0.0
    %650 = vmatpush1.msra.mxu0 0.0
    %651 = vmatprep.subr.mxu0 0.0
    %652 = vmatpush1.msra.mxu0 0.0
    %653 = vmatprep.subr.mxu0 0.0
    %654 = vmatpush1.msra.mxu0 0.0
    %655 = vmatprep.subr.mxu0 0.0
    %656 = vmatpush1.msra.mxu0 0.0
    %657 = vmatprep.mubr.f32.mxu0 0.0
    %658 = vmatmul.mubr.f32.gmra.mrb[0].mxu0 %v591
    %v659 = vpop.f32.mrb[0].mxu0
    %v660 = vadd.f32 0.0, %v659
    %v661 = vpop.f32.mrb[0].mxu0
    %v662 = vadd.f32 0.0, %v661
    %663 = vdwg.mxu0
    %v664 = vadd.f32 %v577, %v660
    %v665 = vadd.f32 %v578, %v662
    %666 = vrot.lane.b32.xlu0 %v15, 112
    %v667 = vpop.permute.xlu0 %666
    %668 = vrot.lane.b32.xlu0 %v16, 112
    %v669 = vpop.permute.xlu0 %668
    %vm670 = vcmp.lt.s32.totalorder %v18, 112
    %v671 = vsel %vm670, %v667, %v669
    %v672 = vsel %vm670, %v669, %v667
    %v673 = vmul.f32 %v671, %v62
    %v674 = vmul.f32 %v672, %v63
    %s675 = scalar_lea.vmem %s1, 56
    %v676 = vld [vmem:[%s675] sm:$0xff]
    %v678 = vsel %vm82, %v676, 0
    %680 = vmatprep.subr.mxu0 %v674
    %681 = vmatpush1.msra.mxu0 %v673
    %682 = vmatprep.subr.mxu0 0.0
    %683 = vmatpush1.msra.mxu0 0.0
    %684 = vmatprep.subr.mxu0 0.0
    %685 = vmatpush1.msra.mxu0 0.0
    %686 = vmatprep.subr.mxu0 0.0
    %687 = vmatpush1.msra.mxu0 0.0
    %688 = vmatprep.subr.mxu0 0.0
    %689 = vmatpush1.msra.mxu0 0.0
    %690 = vmatprep.subr.mxu0 0.0
    %691 = vmatpush1.msra.mxu0 0.0
    %692 = vmatprep.subr.mxu0 0.0
    %693 = vmatpush1.msra.mxu0 0.0
    %694 = vmatprep.subr.mxu0 0.0
    %695 = vmatpush1.msra.mxu0 0.0
    %696 = vmatprep.subr.mxu0 0.0
    %697 = vmatpush1.msra.mxu0 0.0
    %698 = vmatprep.subr.mxu0 0.0
    %699 = vmatpush1.msra.mxu0 0.0
    %700 = vmatprep.subr.mxu0 0.0
    %701 = vmatpush1.msra.mxu0 0.0
    %702 = vmatprep.subr.mxu0 0.0
    %703 = vmatpush1.msra.mxu0 0.0
    %704 = vmatprep.subr.mxu0 0.0
    %705 = vmatpush1.msra.mxu0 0.0
    %706 = vmatprep.subr.mxu0 0.0
    %707 = vmatpush1.msra.mxu0 0.0
    %708 = vmatprep.subr.mxu0 0.0
    %709 = vmatpush1.msra.mxu0 0.0
    %710 = vmatprep.subr.mxu0 0.0
    %711 = vmatpush1.msra.mxu0 0.0
    %712 = vmatprep.subr.mxu0 0.0
    %713 = vmatpush1.msra.mxu0 0.0
    %714 = vmatprep.subr.mxu0 0.0
    %715 = vmatpush1.msra.mxu0 0.0
    %716 = vmatprep.subr.mxu0 0.0
    %717 = vmatpush1.msra.mxu0 0.0
    %718 = vmatprep.subr.mxu0 0.0
    %719 = vmatpush1.msra.mxu0 0.0
    %720 = vmatprep.subr.mxu0 0.0
    %721 = vmatpush1.msra.mxu0 0.0
    %722 = vmatprep.subr.mxu0 0.0
    %723 = vmatpush1.msra.mxu0 0.0
    %724 = vmatprep.subr.mxu0 0.0
    %725 = vmatpush1.msra.mxu0 0.0
    %726 = vmatprep.subr.mxu0 0.0
    %727 = vmatpush1.msra.mxu0 0.0
    %728 = vmatprep.subr.mxu0 0.0
    %729 = vmatpush1.msra.mxu0 0.0
    %730 = vmatprep.subr.mxu0 0.0
    %731 = vmatpush1.msra.mxu0 0.0
    %732 = vmatprep.subr.mxu0 0.0
    %733 = vmatpush1.msra.mxu0 0.0
    %734 = vmatprep.subr.mxu0 0.0
    %735 = vmatpush1.msra.mxu0 0.0
    %736 = vmatprep.subr.mxu0 0.0
    %737 = vmatpush1.msra.mxu0 0.0
    %738 = vmatprep.subr.mxu0 0.0
    %739 = vmatpush1.msra.mxu0 0.0
    %740 = vmatprep.subr.mxu0 0.0
    %741 = vmatpush1.msra.mxu0 0.0
    %742 = vmatprep.subr.mxu0 0.0
    %743 = vmatpush1.msra.mxu0 0.0
    %744 = vmatprep.mubr.f32.mxu0 0.0
    %745 = vmatmul.mubr.f32.gmra.mrb[0].mxu0 %v678
    %v746 = vpop.f32.mrb[0].mxu0
    %v747 = vadd.f32 0.0, %v746
    %v748 = vpop.f32.mrb[0].mxu0
    %v749 = vadd.f32 0.0, %v748
    %750 = vdwg.mxu0
    %v751 = vadd.f32 %v664, %v747
    %v752 = vadd.f32 %v665, %v749
    %753 = vrot.lane.b32.xlu0 %v15, 111
    %v754 = vpop.permute.xlu0 %753
    %755 = vrot.lane.b32.xlu0 %v16, 111
    %v756 = vpop.permute.xlu0 %755
    %vm757 = vcmp.lt.s32.totalorder %v18, 111
    %v758 = vsel %vm757, %v754, %v756
    %v759 = vsel %vm757, %v756, %v754
    %v760 = vmul.f32 %v758, %v68
    %v761 = vmul.f32 %v759, %v69
    %s762 = scalar_lea.vmem %s1, 64
    %v763 = vld [vmem:[%s762] sm:$0xff]
    %v765 = vsel %vm82, %v763, 0
    %767 = vmatprep.subr.mxu0 %v761
    %768 = vmatpush1.msra.mxu0 %v760
    %769 = vmatprep.subr.mxu0 0.0
    %770 = vmatpush1.msra.mxu0 0.0
    %771 = vmatprep.subr.mxu0 0.0
    %772 = vmatpush1.msra.mxu0 0.0
    %773 = vmatprep.subr.mxu0 0.0
    %774 = vmatpush1.msra.mxu0 0.0
    %775 = vmatprep.subr.mxu0 0.0
    %776 = vmatpush1.msra.mxu0 0.0
    %777 = vmatprep.subr.mxu0 0.0
    %778 = vmatpush1.msra.mxu0 0.0
    %779 = vmatprep.subr.mxu0 0.0
    %780 = vmatpush1.msra.mxu0 0.0
    %781 = vmatprep.subr.mxu0 0.0
    %782 = vmatpush1.msra.mxu0 0.0
    %783 = vmatprep.subr.mxu0 0.0
    %784 = vmatpush1.msra.mxu0 0.0
    %785 = vmatprep.subr.mxu0 0.0
    %786 = vmatpush1.msra.mxu0 0.0
    %787 = vmatprep.subr.mxu0 0.0
    %788 = vmatpush1.msra.mxu0 0.0
    %789 = vmatprep.subr.mxu0 0.0
    %790 = vmatpush1.msra.mxu0 0.0
    %791 = vmatprep.subr.mxu0 0.0
    %792 = vmatpush1.msra.mxu0 0.0
    %793 = vmatprep.subr.mxu0 0.0
    %794 = vmatpush1.msra.mxu0 0.0
    %795 = vmatprep.subr.mxu0 0.0
    %796 = vmatpush1.msra.mxu0 0.0
    %797 = vmatprep.subr.mxu0 0.0
    %798 = vmatpush1.msra.mxu0 0.0
    %799 = vmatprep.subr.mxu0 0.0
    %800 = vmatpush1.msra.mxu0 0.0
    %801 = vmatprep.subr.mxu0 0.0
    %802 = vmatpush1.msra.mxu0 0.0
    %803 = vmatprep.subr.mxu0 0.0
    %804 = vmatpush1.msra.mxu0 0.0
    %805 = vmatprep.subr.mxu0 0.0
    %806 = vmatpush1.msra.mxu0 0.0
    %807 = vmatprep.subr.mxu0 0.0
    %808 = vmatpush1.msra.mxu0 0.0
    %809 = vmatprep.subr.mxu0 0.0
    %810 = vmatpush1.msra.mxu0 0.0
    %811 = vmatprep.subr.mxu0 0.0
    %812 = vmatpush1.msra.mxu0 0.0
    %813 = vmatprep.subr.mxu0 0.0
    %814 = vmatpush1.msra.mxu0 0.0
    %815 = vmatprep.subr.mxu0 0.0
    %816 = vmatpush1.msra.mxu0 0.0
    %817 = vmatprep.subr.mxu0 0.0
    %818 = vmatpush1.msra.mxu0 0.0
    %819 = vmatprep.subr.mxu0 0.0
    %820 = vmatpush1.msra.mxu0 0.0
    %821 = vmatprep.subr.mxu0 0.0
    %822 = vmatpush1.msra.mxu0 0.0
    %823 = vmatprep.subr.mxu0 0.0
    %824 = vmatpush1.msra.mxu0 0.0
    %825 = vmatprep.subr.mxu0 0.0
    %826 = vmatpush1.msra.mxu0 0.0
    %827 = vmatprep.subr.mxu0 0.0
    %828 = vmatpush1.msra.mxu0 0.0
    %829 = vmatprep.subr.mxu0 0.0
    %830 = vmatpush1.msra.mxu0 0.0
    %831 = vmatprep.mubr.f32.mxu0 0.0
    %832 = vmatmul.mubr.f32.gmra.mrb[0].mxu0 %v765
    %v833 = vpop.f32.mrb[0].mxu0
    %v834 = vadd.f32 0.0, %v833
    %v835 = vpop.f32.mrb[0].mxu0
    %v836 = vadd.f32 0.0, %v835
    %837 = vdwg.mxu0
    %v838 = vadd.f32 %v751, %v834
    %v839 = vadd.f32 %v752, %v836
    %v840 = vadd.f32 %v838, %v839
    %841 = vadd.xlane.f32.xlu0 %v840
    %v842 = vpop.xlane.xlu0 %841
    %v843 = vmul.f32 %v838, %v838
    %v844 = vmul.f32 %v839, %v839
    %v845 = vadd.f32 %v843, %v844
    %846 = vadd.xlane.f32.xlu0 %v845
    %v847 = vpop.xlane.xlu0 %846
    %v848 = vmul.f32 %v842, 0.00390625
    %v849 = vmul.f32 %v847, 0.00390625
    %v850 = vmul.f32 %v848, %v848
    %v851 = vsub.f32 %v849, %v850
    %v852 = vmax.f32 %v851, 0.0
    %v853 = vsub.f32 %v838, %v848
    %v854 = vsub.f32 %v839, %v848
    %v855 = vadd.f32 %v852, 1e-05
    %v856 = vrsqrt.pop %v855
    %v857 = vmul.f32 %v853, %v856
    %v858 = vmul.f32 %v854, %v856
    %v859 = vmax.f32 %v857, 0.0
    %v860 = vmax.f32 %v858, 0.0
    %s861 = scalar_lea.vmem %s2, 32
    %v862 = vld [vmem:[%s861] sm:$0xff]
    %863 = vrot.lane.b32.xlu0 %v859, 17
    %v864 = vpop.permute.xlu0 %863
    %865 = vrot.lane.b32.xlu0 %v860, 17
    %v866 = vpop.permute.xlu0 %865
    %v867 = vsel %vm76, %v864, %v866
    %v868 = vsel %vm76, %v866, %v864
    %v869 = vmul.f32 %v868, %v34
    %v870 = vmul.f32 %v867, %v35
    %v871 = vld [vmem:[%s2] sm:$0xff]
    %v873 = vsel %vm82, %v871, 0
    %875 = vmatprep.subr.mxu0 %v870
    %876 = vmatpush1.msra.mxu0 %v869
    %877 = vmatprep.subr.mxu0 0.0
    %878 = vmatpush1.msra.mxu0 0.0
    %879 = vmatprep.subr.mxu0 0.0
    %880 = vmatpush1.msra.mxu0 0.0
    %881 = vmatprep.subr.mxu0 0.0
    %882 = vmatpush1.msra.mxu0 0.0
    %883 = vmatprep.subr.mxu0 0.0
    %884 = vmatpush1.msra.mxu0 0.0
    %885 = vmatprep.subr.mxu0 0.0
    %886 = vmatpush1.msra.mxu0 0.0
    %887 = vmatprep.subr.mxu0 0.0
    %888 = vmatpush1.msra.mxu0 0.0
    %889 = vmatprep.subr.mxu0 0.0
    %890 = vmatpush1.msra.mxu0 0.0
    %891 = vmatprep.subr.mxu0 0.0
    %892 = vmatpush1.msra.mxu0 0.0
    %893 = vmatprep.subr.mxu0 0.0
    %894 = vmatpush1.msra.mxu0 0.0
    %895 = vmatprep.subr.mxu0 0.0
    %896 = vmatpush1.msra.mxu0 0.0
    %897 = vmatprep.subr.mxu0 0.0
    %898 = vmatpush1.msra.mxu0 0.0
    %899 = vmatprep.subr.mxu0 0.0
    %900 = vmatpush1.msra.mxu0 0.0
    %901 = vmatprep.subr.mxu0 0.0
    %902 = vmatpush1.msra.mxu0 0.0
    %903 = vmatprep.subr.mxu0 0.0
    %904 = vmatpush1.msra.mxu0 0.0
    %905 = vmatprep.subr.mxu0 0.0
    %906 = vmatpush1.msra.mxu0 0.0
    %907 = vmatprep.subr.mxu0 0.0
    %908 = vmatpush1.msra.mxu0 0.0
    %909 = vmatprep.subr.mxu0 0.0
    %910 = vmatpush1.msra.mxu0 0.0
    %911 = vmatprep.subr.mxu0 0.0
    %912 = vmatpush1.msra.mxu0 0.0
    %913 = vmatprep.subr.mxu0 0.0
    %914 = vmatpush1.msra.mxu0 0.0
    %915 = vmatprep.subr.mxu0 0.0
    %916 = vmatpush1.msra.mxu0 0.0
    %917 = vmatprep.subr.mxu0 0.0
    %918 = vmatpush1.msra.mxu0 0.0
    %919 = vmatprep.subr.mxu0 0.0
    %920 = vmatpush1.msra.mxu0 0.0
    %921 = vmatprep.subr.mxu0 0.0
    %922 = vmatpush1.msra.mxu0 0.0
    %923 = vmatprep.subr.mxu0 0.0
    %924 = vmatpush1.msra.mxu0 0.0
    %925 = vmatprep.subr.mxu0 0.0
    %926 = vmatpush1.msra.mxu0 0.0
    %927 = vmatprep.subr.mxu0 0.0
    %928 = vmatpush1.msra.mxu0 0.0
    %929 = vmatprep.subr.mxu0 0.0
    %930 = vmatpush1.msra.mxu0 0.0
    %931 = vmatprep.subr.mxu0 0.0
    %932 = vmatpush1.msra.mxu0 0.0
    %933 = vmatprep.subr.mxu0 0.0
    %934 = vmatpush1.msra.mxu0 0.0
    %935 = vmatprep.subr.mxu0 0.0
    %936 = vmatpush1.msra.mxu0 0.0
    %937 = vmatprep.subr.mxu0 0.0
    %938 = vmatpush1.msra.mxu0 0.0
    %939 = vmatprep.mubr.f32.mxu0 0.0
    %940 = vmatmul.mubr.f32.gmra.mrb[0].mxu0 %v873
    %v941 = vpop.f32.mrb[0].mxu0
    %v942 = vadd.f32 0.0, %v941
    %v943 = vpop.f32.mrb[0].mxu0
    %v944 = vadd.f32 0.0, %v943
    %945 = vdwg.mxu0
    %v947 = vsel %vm82, %v862, 0
    %949 = vmatprep.subr.mxu0 %v860
    %950 = vmatpush1.msra.mxu0 %v859
    %951 = vmatprep.subr.mxu0 0.0
    %952 = vmatpush1.msra.mxu0 0.0
    %953 = vmatprep.subr.mxu0 0.0
    %954 = vmatpush1.msra.mxu0 0.0
    %955 = vmatprep.subr.mxu0 0.0
    %956 = vmatpush1.msra.mxu0 0.0
    %957 = vmatprep.subr.mxu0 0.0
    %958 = vmatpush1.msra.mxu0 0.0
    %959 = vmatprep.subr.mxu0 0.0
    %960 = vmatpush1.msra.mxu0 0.0
    %961 = vmatprep.subr.mxu0 0.0
    %962 = vmatpush1.msra.mxu0 0.0
    %963 = vmatprep.subr.mxu0 0.0
    %964 = vmatpush1.msra.mxu0 0.0
    %965 = vmatprep.subr.mxu0 0.0
    %966 = vmatpush1.msra.mxu0 0.0
    %967 = vmatprep.subr.mxu0 0.0
    %968 = vmatpush1.msra.mxu0 0.0
    %969 = vmatprep.subr.mxu0 0.0
    %970 = vmatpush1.msra.mxu0 0.0
    %971 = vmatprep.subr.mxu0 0.0
    %972 = vmatpush1.msra.mxu0 0.0
    %973 = vmatprep.subr.mxu0 0.0
    %974 = vmatpush1.msra.mxu0 0.0
    %975 = vmatprep.subr.mxu0 0.0
    %976 = vmatpush1.msra.mxu0 0.0
    %977 = vmatprep.subr.mxu0 0.0
    %978 = vmatpush1.msra.mxu0 0.0
    %979 = vmatprep.subr.mxu0 0.0
    %980 = vmatpush1.msra.mxu0 0.0
    %981 = vmatprep.subr.mxu0 0.0
    %982 = vmatpush1.msra.mxu0 0.0
    %983 = vmatprep.subr.mxu0 0.0
    %984 = vmatpush1.msra.mxu0 0.0
    %985 = vmatprep.subr.mxu0 0.0
    %986 = vmatpush1.msra.mxu0 0.0
    %987 = vmatprep.subr.mxu0 0.0
    %988 = vmatpush1.msra.mxu0 0.0
    %989 = vmatprep.subr.mxu0 0.0
    %990 = vmatpush1.msra.mxu0 0.0
    %991 = vmatprep.subr.mxu0 0.0
    %992 = vmatpush1.msra.mxu0 0.0
    %993 = vmatprep.subr.mxu0 0.0
    %994 = vmatpush1.msra.mxu0 0.0
    %995 = vmatprep.subr.mxu0 0.0
    %996 = vmatpush1.msra.mxu0 0.0
    %997 = vmatprep.subr.mxu0 0.0
    %998 = vmatpush1.msra.mxu0 0.0
    %999 = vmatprep.subr.mxu0 0.0
    %1000 = vmatpush1.msra.mxu0 0.0
    %1001 = vmatprep.subr.mxu0 0.0
    %1002 = vmatpush1.msra.mxu0 0.0
    %1003 = vmatprep.subr.mxu0 0.0
    %1004 = vmatpush1.msra.mxu0 0.0
    %1005 = vmatprep.subr.mxu0 0.0
    %1006 = vmatpush1.msra.mxu0 0.0
    %1007 = vmatprep.subr.mxu0 0.0
    %1008 = vmatpush1.msra.mxu0 0.0
    %1009 = vmatprep.subr.mxu0 0.0
    %1010 = vmatpush1.msra.mxu0 0.0
    %1011 = vmatprep.subr.mxu0 0.0
    %1012 = vmatpush1.msra.mxu0 0.0
    %1013 = vmatprep.mubr.f32.mxu0 0.0
    %1014 = vmatmul.mubr.f32.gmra.mrb[0].mxu0 %v947
    %v1015 = vpop.f32.mrb[0].mxu0
    %v1016 = vadd.f32 %v942, %v1015
    %v1017 = vpop.f32.mrb[0].mxu0
    %v1018 = vadd.f32 %v944, %v1017
    %1019 = vdwg.mxu0
    %1020 = vrot.lane.b32.xlu0 %v859, 16
    %v1021 = vpop.permute.xlu0 %1020
    %1022 = vrot.lane.b32.xlu0 %v860, 16
    %v1023 = vpop.permute.xlu0 %1022
    %v1024 = vsel %vm235, %v1021, %v1023
    %v1025 = vsel %vm235, %v1023, %v1021
    %v1026 = vmul.f32 %v1025, %v38
    %v1027 = vmul.f32 %v1024, %v39
    %s1028 = scalar_lea.vmem %s2, 8
    %v1029 = vld [vmem:[%s1028] sm:$0xff]
    %v1031 = vsel %vm82, %v1029, 0
    %1033 = vmatprep.subr.mxu0 %v1027
    %1034 = vmatpush1.msra.mxu0 %v1026
    %1035 = vmatprep.subr.mxu0 0.0
    %1036 = vmatpush1.msra.mxu0 0.0
    %1037 = vmatprep.subr.mxu0 0.0
    %1038 = vmatpush1.msra.mxu0 0.0
    %1039 = vmatprep.subr.mxu0 0.0
    %1040 = vmatpush1.msra.mxu0 0.0
    %1041 = vmatprep.subr.mxu0 0.0
    %1042 = vmatpush1.msra.mxu0 0.0
    %1043 = vmatprep.subr.mxu0 0.0
    %1044 = vmatpush1.msra.mxu0 0.0
    %1045 = vmatprep.subr.mxu0 0.0
    %1046 = vmatpush1.msra.mxu0 0.0
    %1047 = vmatprep.subr.mxu0 0.0
    %1048 = vmatpush1.msra.mxu0 0.0
    %1049 = vmatprep.subr.mxu0 0.0
    %1050 = vmatpush1.msra.mxu0 0.0
    %1051 = vmatprep.subr.mxu0 0.0
    %1052 = vmatpush1.msra.mxu0 0.0
    %1053 = vmatprep.subr.mxu0 0.0
    %1054 = vmatpush1.msra.mxu0 0.0
    %1055 = vmatprep.subr.mxu0 0.0
    %1056 = vmatpush1.msra.mxu0 0.0
    %1057 = vmatprep.subr.mxu0 0.0
    %1058 = vmatpush1.msra.mxu0 0.0
    %1059 = vmatprep.subr.mxu0 0.0
    %1060 = vmatpush1.msra.mxu0 0.0
    %1061 = vmatprep.subr.mxu0 0.0
    %1062 = vmatpush1.msra.mxu0 0.0
    %1063 = vmatprep.subr.mxu0 0.0
    %1064 = vmatpush1.msra.mxu0 0.0
    %1065 = vmatprep.subr.mxu0 0.0
    %1066 = vmatpush1.msra.mxu0 0.0
    %1067 = vmatprep.subr.mxu0 0.0
    %1068 = vmatpush1.msra.mxu0 0.0
    %1069 = vmatprep.subr.mxu0 0.0
    %1070 = vmatpush1.msra.mxu0 0.0
    %1071 = vmatprep.subr.mxu0 0.0
    %1072 = vmatpush1.msra.mxu0 0.0
    %1073 = vmatprep.subr.mxu0 0.0
    %1074 = vmatpush1.msra.mxu0 0.0
    %1075 = vmatprep.subr.mxu0 0.0
    %1076 = vmatpush1.msra.mxu0 0.0
    %1077 = vmatprep.subr.mxu0 0.0
    %1078 = vmatpush1.msra.mxu0 0.0
    %1079 = vmatprep.subr.mxu0 0.0
    %1080 = vmatpush1.msra.mxu0 0.0
    %1081 = vmatprep.subr.mxu0 0.0
    %1082 = vmatpush1.msra.mxu0 0.0
    %1083 = vmatprep.subr.mxu0 0.0
    %1084 = vmatpush1.msra.mxu0 0.0
    %1085 = vmatprep.subr.mxu0 0.0
    %1086 = vmatpush1.msra.mxu0 0.0
    %1087 = vmatprep.subr.mxu0 0.0
    %1088 = vmatpush1.msra.mxu0 0.0
    %1089 = vmatprep.subr.mxu0 0.0
    %1090 = vmatpush1.msra.mxu0 0.0
    %1091 = vmatprep.subr.mxu0 0.0
    %1092 = vmatpush1.msra.mxu0 0.0
    %1093 = vmatprep.subr.mxu0 0.0
    %1094 = vmatpush1.msra.mxu0 0.0
    %1095 = vmatprep.subr.mxu0 0.0
    %1096 = vmatpush1.msra.mxu0 0.0
    %1097 = vmatprep.mubr.f32.mxu0 0.0
    %1098 = vmatmul.mubr.f32.gmra.mrb[0].mxu0 %v1031
    %v1099 = vpop.f32.mrb[0].mxu0
    %v1100 = vadd.f32 0.0, %v1099
    %v1101 = vpop.f32.mrb[0].mxu0
    %v1102 = vadd.f32 0.0, %v1101
    %1103 = vdwg.mxu0
    %v1104 = vadd.f32 %v1016, %v1100
    %v1105 = vadd.f32 %v1018, %v1102
    %1106 = vrot.lane.b32.xlu0 %v859, 15
    %v1107 = vpop.permute.xlu0 %1106
    %1108 = vrot.lane.b32.xlu0 %v860, 15
    %v1109 = vpop.permute.xlu0 %1108
    %v1110 = vsel %vm322, %v1107, %v1109
    %v1111 = vsel %vm322, %v1109, %v1107
    %v1112 = vmul.f32 %v1111, %v44
    %v1113 = vmul.f32 %v1110, %v45
    %s1114 = scalar_lea.vmem %s2, 16
    %v1115 = vld [vmem:[%s1114] sm:$0xff]
    %v1117 = vsel %vm82, %v1115, 0
    %1119 = vmatprep.subr.mxu0 %v1113
    %1120 = vmatpush1.msra.mxu0 %v1112
    %1121 = vmatprep.subr.mxu0 0.0
    %1122 = vmatpush1.msra.mxu0 0.0
    %1123 = vmatprep.subr.mxu0 0.0
    %1124 = vmatpush1.msra.mxu0 0.0
    %1125 = vmatprep.subr.mxu0 0.0
    %1126 = vmatpush1.msra.mxu0 0.0
    %1127 = vmatprep.subr.mxu0 0.0
    %1128 = vmatpush1.msra.mxu0 0.0
    %1129 = vmatprep.subr.mxu0 0.0
    %1130 = vmatpush1.msra.mxu0 0.0
    %1131 = vmatprep.subr.mxu0 0.0
    %1132 = vmatpush1.msra.mxu0 0.0
    %1133 = vmatprep.subr.mxu0 0.0
    %1134 = vmatpush1.msra.mxu0 0.0
    %1135 = vmatprep.subr.mxu0 0.0
    %1136 = vmatpush1.msra.mxu0 0.0
    %1137 = vmatprep.subr.mxu0 0.0
    %1138 = vmatpush1.msra.mxu0 0.0
    %1139 = vmatprep.subr.mxu0 0.0
    %1140 = vmatpush1.msra.mxu0 0.0
    %1141 = vmatprep.subr.mxu0 0.0
    %1142 = vmatpush1.msra.mxu0 0.0
    %1143 = vmatprep.subr.mxu0 0.0
    %1144 = vmatpush1.msra.mxu0 0.0
    %1145 = vmatprep.subr.mxu0 0.0
    %1146 = vmatpush1.msra.mxu0 0.0
    %1147 = vmatprep.subr.mxu0 0.0
    %1148 = vmatpush1.msra.mxu0 0.0
    %1149 = vmatprep.subr.mxu0 0.0
    %1150 = vmatpush1.msra.mxu0 0.0
    %1151 = vmatprep.subr.mxu0 0.0
    %1152 = vmatpush1.msra.mxu0 0.0
    %1153 = vmatprep.subr.mxu0 0.0
    %1154 = vmatpush1.msra.mxu0 0.0
    %1155 = vmatprep.subr.mxu0 0.0
    %1156 = vmatpush1.msra.mxu0 0.0
    %1157 = vmatprep.subr.mxu0 0.0
    %1158 = vmatpush1.msra.mxu0 0.0
    %1159 = vmatprep.subr.mxu0 0.0
    %1160 = vmatpush1.msra.mxu0 0.0
    %1161 = vmatprep.subr.mxu0 0.0
    %1162 = vmatpush1.msra.mxu0 0.0
    %1163 = vmatprep.subr.mxu0 0.0
    %1164 = vmatpush1.msra.mxu0 0.0
    %1165 = vmatprep.subr.mxu0 0.0
    %1166 = vmatpush1.msra.mxu0 0.0
    %1167 = vmatprep.subr.mxu0 0.0
    %1168 = vmatpush1.msra.mxu0 0.0
    %1169 = vmatprep.subr.mxu0 0.0
    %1170 = vmatpush1.msra.mxu0 0.0
    %1171 = vmatprep.subr.mxu0 0.0
    %1172 = vmatpush1.msra.mxu0 0.0
    %1173 = vmatprep.subr.mxu0 0.0
    %1174 = vmatpush1.msra.mxu0 0.0
    %1175 = vmatprep.subr.mxu0 0.0
    %1176 = vmatpush1.msra.mxu0 0.0
    %1177 = vmatprep.subr.mxu0 0.0
    %1178 = vmatpush1.msra.mxu0 0.0
    %1179 = vmatprep.subr.mxu0 0.0
    %1180 = vmatpush1.msra.mxu0 0.0
    %1181 = vmatprep.subr.mxu0 0.0
    %1182 = vmatpush1.msra.mxu0 0.0
    %1183 = vmatprep.mubr.f32.mxu0 0.0
    %1184 = vmatmul.mubr.f32.gmra.mrb[0].mxu0 %v1117
    %v1185 = vpop.f32.mrb[0].mxu0
    %v1186 = vadd.f32 0.0, %v1185
    %v1187 = vpop.f32.mrb[0].mxu0
    %v1188 = vadd.f32 0.0, %v1187
    %1189 = vdwg.mxu0
    %v1190 = vadd.f32 %v1104, %v1186
    %v1191 = vadd.f32 %v1105, %v1188
    %1192 = vrot.lane.b32.xlu0 %v859, 1
    %v1193 = vpop.permute.xlu0 %1192
    %1194 = vrot.lane.b32.xlu0 %v860, 1
    %v1195 = vpop.permute.xlu0 %1194
    %v1196 = vsel %vm409, %v1193, %v1195
    %v1197 = vsel %vm409, %v1195, %v1193
    %v1198 = vmul.f32 %v1197, %v48
    %v1199 = vmul.f32 %v1196, %v49
    %s1200 = scalar_lea.vmem %s2, 24
    %v1201 = vld [vmem:[%s1200] sm:$0xff]
    %v1203 = vsel %vm82, %v1201, 0
    %1205 = vmatprep.subr.mxu0 %v1199
    %1206 = vmatpush1.msra.mxu0 %v1198
    %1207 = vmatprep.subr.mxu0 0.0
    %1208 = vmatpush1.msra.mxu0 0.0
    %1209 = vmatprep.subr.mxu0 0.0
    %1210 = vmatpush1.msra.mxu0 0.0
    %1211 = vmatprep.subr.mxu0 0.0
    %1212 = vmatpush1.msra.mxu0 0.0
    %1213 = vmatprep.subr.mxu0 0.0
    %1214 = vmatpush1.msra.mxu0 0.0
    %1215 = vmatprep.subr.mxu0 0.0
    %1216 = vmatpush1.msra.mxu0 0.0
    %1217 = vmatprep.subr.mxu0 0.0
    %1218 = vmatpush1.msra.mxu0 0.0
    %1219 = vmatprep.subr.mxu0 0.0
    %1220 = vmatpush1.msra.mxu0 0.0
    %1221 = vmatprep.subr.mxu0 0.0
    %1222 = vmatpush1.msra.mxu0 0.0
    %1223 = vmatprep.subr.mxu0 0.0
    %1224 = vmatpush1.msra.mxu0 0.0
    %1225 = vmatprep.subr.mxu0 0.0
    %1226 = vmatpush1.msra.mxu0 0.0
    %1227 = vmatprep.subr.mxu0 0.0
    %1228 = vmatpush1.msra.mxu0 0.0
    %1229 = vmatprep.subr.mxu0 0.0
    %1230 = vmatpush1.msra.mxu0 0.0
    %1231 = vmatprep.subr.mxu0 0.0
    %1232 = vmatpush1.msra.mxu0 0.0
    %1233 = vmatprep.subr.mxu0 0.0
    %1234 = vmatpush1.msra.mxu0 0.0
    %1235 = vmatprep.subr.mxu0 0.0
    %1236 = vmatpush1.msra.mxu0 0.0
    %1237 = vmatprep.subr.mxu0 0.0
    %1238 = vmatpush1.msra.mxu0 0.0
    %1239 = vmatprep.subr.mxu0 0.0
    %1240 = vmatpush1.msra.mxu0 0.0
    %1241 = vmatprep.subr.mxu0 0.0
    %1242 = vmatpush1.msra.mxu0 0.0
    %1243 = vmatprep.subr.mxu0 0.0
    %1244 = vmatpush1.msra.mxu0 0.0
    %1245 = vmatprep.subr.mxu0 0.0
    %1246 = vmatpush1.msra.mxu0 0.0
    %1247 = vmatprep.subr.mxu0 0.0
    %1248 = vmatpush1.msra.mxu0 0.0
    %1249 = vmatprep.subr.mxu0 0.0
    %1250 = vmatpush1.msra.mxu0 0.0
    %1251 = vmatprep.subr.mxu0 0.0
    %1252 = vmatpush1.msra.mxu0 0.0
    %1253 = vmatprep.subr.mxu0 0.0
    %1254 = vmatpush1.msra.mxu0 0.0
    %1255 = vmatprep.subr.mxu0 0.0
    %1256 = vmatpush1.msra.mxu0 0.0
    %1257 = vmatprep.subr.mxu0 0.0
    %1258 = vmatpush1.msra.mxu0 0.0
    %1259 = vmatprep.subr.mxu0 0.0
    %1260 = vmatpush1.msra.mxu0 0.0
    %1261 = vmatprep.subr.mxu0 0.0
    %1262 = vmatpush1.msra.mxu0 0.0
    %1263 = vmatprep.subr.mxu0 0.0
    %1264 = vmatpush1.msra.mxu0 0.0
    %1265 = vmatprep.subr.mxu0 0.0
    %1266 = vmatpush1.msra.mxu0 0.0
    %1267 = vmatprep.subr.mxu0 0.0
    %1268 = vmatpush1.msra.mxu0 0.0
    %1269 = vmatprep.mubr.f32.mxu0 0.0
    %1270 = vmatmul.mubr.f32.gmra.mrb[0].mxu0 %v1203
    %v1271 = vpop.f32.mrb[0].mxu0
    %v1272 = vadd.f32 0.0, %v1271
    %v1273 = vpop.f32.mrb[0].mxu0
    %v1274 = vadd.f32 0.0, %v1273
    %1275 = vdwg.mxu0
    %v1276 = vadd.f32 %v1190, %v1272
    %v1277 = vadd.f32 %v1191, %v1274
    %1278 = vrot.lane.b32.xlu0 %v859, 127
    %v1279 = vpop.permute.xlu0 %1278
    %1280 = vrot.lane.b32.xlu0 %v860, 127
    %v1281 = vpop.permute.xlu0 %1280
    %v1282 = vsel %vm496, %v1279, %v1281
    %v1283 = vsel %vm496, %v1281, %v1279
    %v1284 = vmul.f32 %v1282, %v52
    %v1285 = vmul.f32 %v1283, %v53
    %s1286 = scalar_lea.vmem %s2, 40
    %v1287 = vld [vmem:[%s1286] sm:$0xff]
    %v1289 = vsel %vm82, %v1287, 0
    %1291 = vmatprep.subr.mxu0 %v1285
    %1292 = vmatpush1.msra.mxu0 %v1284
    %1293 = vmatprep.subr.mxu0 0.0
    %1294 = vmatpush1.msra.mxu0 0.0
    %1295 = vmatprep.subr.mxu0 0.0
    %1296 = vmatpush1.msra.mxu0 0.0
    %1297 = vmatprep.subr.mxu0 0.0
    %1298 = vmatpush1.msra.mxu0 0.0
    %1299 = vmatprep.subr.mxu0 0.0
    %1300 = vmatpush1.msra.mxu0 0.0
    %1301 = vmatprep.subr.mxu0 0.0
    %1302 = vmatpush1.msra.mxu0 0.0
    %1303 = vmatprep.subr.mxu0 0.0
    %1304 = vmatpush1.msra.mxu0 0.0
    %1305 = vmatprep.subr.mxu0 0.0
    %1306 = vmatpush1.msra.mxu0 0.0
    %1307 = vmatprep.subr.mxu0 0.0
    %1308 = vmatpush1.msra.mxu0 0.0
    %1309 = vmatprep.subr.mxu0 0.0
    %1310 = vmatpush1.msra.mxu0 0.0
    %1311 = vmatprep.subr.mxu0 0.0
    %1312 = vmatpush1.msra.mxu0 0.0
    %1313 = vmatprep.subr.mxu0 0.0
    %1314 = vmatpush1.msra.mxu0 0.0
    %1315 = vmatprep.subr.mxu0 0.0
    %1316 = vmatpush1.msra.mxu0 0.0
    %1317 = vmatprep.subr.mxu0 0.0
    %1318 = vmatpush1.msra.mxu0 0.0
    %1319 = vmatprep.subr.mxu0 0.0
    %1320 = vmatpush1.msra.mxu0 0.0
    %1321 = vmatprep.subr.mxu0 0.0
    %1322 = vmatpush1.msra.mxu0 0.0
    %1323 = vmatprep.subr.mxu0 0.0
    %1324 = vmatpush1.msra.mxu0 0.0
    %1325 = vmatprep.subr.mxu0 0.0
    %1326 = vmatpush1.msra.mxu0 0.0
    %1327 = vmatprep.subr.mxu0 0.0
    %1328 = vmatpush1.msra.mxu0 0.0
    %1329 = vmatprep.subr.mxu0 0.0
    %1330 = vmatpush1.msra.mxu0 0.0
    %1331 = vmatprep.subr.mxu0 0.0
    %1332 = vmatpush1.msra.mxu0 0.0
    %1333 = vmatprep.subr.mxu0 0.0
    %1334 = vmatpush1.msra.mxu0 0.0
    %1335 = vmatprep.subr.mxu0 0.0
    %1336 = vmatpush1.msra.mxu0 0.0
    %1337 = vmatprep.subr.mxu0 0.0
    %1338 = vmatpush1.msra.mxu0 0.0
    %1339 = vmatprep.subr.mxu0 0.0
    %1340 = vmatpush1.msra.mxu0 0.0
    %1341 = vmatprep.subr.mxu0 0.0
    %1342 = vmatpush1.msra.mxu0 0.0
    %1343 = vmatprep.subr.mxu0 0.0
    %1344 = vmatpush1.msra.mxu0 0.0
    %1345 = vmatprep.subr.mxu0 0.0
    %1346 = vmatpush1.msra.mxu0 0.0
    %1347 = vmatprep.subr.mxu0 0.0
    %1348 = vmatpush1.msra.mxu0 0.0
    %1349 = vmatprep.subr.mxu0 0.0
    %1350 = vmatpush1.msra.mxu0 0.0
    %1351 = vmatprep.subr.mxu0 0.0
    %1352 = vmatpush1.msra.mxu0 0.0
    %1353 = vmatprep.subr.mxu0 0.0
    %1354 = vmatpush1.msra.mxu0 0.0
    %1355 = vmatprep.mubr.f32.mxu0 0.0
    %1356 = vmatmul.mubr.f32.gmra.mrb[0].mxu0 %v1289
    %v1357 = vpop.f32.mrb[0].mxu0
    %v1358 = vadd.f32 0.0, %v1357
    %v1359 = vpop.f32.mrb[0].mxu0
    %v1360 = vadd.f32 0.0, %v1359
    %1361 = vdwg.mxu0
    %v1362 = vadd.f32 %v1276, %v1358
    %v1363 = vadd.f32 %v1277, %v1360
    %1364 = vrot.lane.b32.xlu0 %v859, 113
    %v1365 = vpop.permute.xlu0 %1364
    %1366 = vrot.lane.b32.xlu0 %v860, 113
    %v1367 = vpop.permute.xlu0 %1366
    %v1368 = vsel %vm583, %v1365, %v1367
    %v1369 = vsel %vm583, %v1367, %v1365
    %v1370 = vmul.f32 %v1368, %v58
    %v1371 = vmul.f32 %v1369, %v59
    %s1372 = scalar_lea.vmem %s2, 48
    %v1373 = vld [vmem:[%s1372] sm:$0xff]
    %v1375 = vsel %vm82, %v1373, 0
    %1377 = vmatprep.subr.mxu0 %v1371
    %1378 = vmatpush1.msra.mxu0 %v1370
    %1379 = vmatprep.subr.mxu0 0.0
    %1380 = vmatpush1.msra.mxu0 0.0
    %1381 = vmatprep.subr.mxu0 0.0
    %1382 = vmatpush1.msra.mxu0 0.0
    %1383 = vmatprep.subr.mxu0 0.0
    %1384 = vmatpush1.msra.mxu0 0.0
    %1385 = vmatprep.subr.mxu0 0.0
    %1386 = vmatpush1.msra.mxu0 0.0
    %1387 = vmatprep.subr.mxu0 0.0
    %1388 = vmatpush1.msra.mxu0 0.0
    %1389 = vmatprep.subr.mxu0 0.0
    %1390 = vmatpush1.msra.mxu0 0.0
    %1391 = vmatprep.subr.mxu0 0.0
    %1392 = vmatpush1.msra.mxu0 0.0
    %1393 = vmatprep.subr.mxu0 0.0
    %1394 = vmatpush1.msra.mxu0 0.0
    %1395 = vmatprep.subr.mxu0 0.0
    %1396 = vmatpush1.msra.mxu0 0.0
    %1397 = vmatprep.subr.mxu0 0.0
    %1398 = vmatpush1.msra.mxu0 0.0
    %1399 = vmatprep.subr.mxu0 0.0
    %1400 = vmatpush1.msra.mxu0 0.0
    %1401 = vmatprep.subr.mxu0 0.0
    %1402 = vmatpush1.msra.mxu0 0.0
    %1403 = vmatprep.subr.mxu0 0.0
    %1404 = vmatpush1.msra.mxu0 0.0
    %1405 = vmatprep.subr.mxu0 0.0
    %1406 = vmatpush1.msra.mxu0 0.0
    %1407 = vmatprep.subr.mxu0 0.0
    %1408 = vmatpush1.msra.mxu0 0.0
    %1409 = vmatprep.subr.mxu0 0.0
    %1410 = vmatpush1.msra.mxu0 0.0
    %1411 = vmatprep.subr.mxu0 0.0
    %1412 = vmatpush1.msra.mxu0 0.0
    %1413 = vmatprep.subr.mxu0 0.0
    %1414 = vmatpush1.msra.mxu0 0.0
    %1415 = vmatprep.subr.mxu0 0.0
    %1416 = vmatpush1.msra.mxu0 0.0
    %1417 = vmatprep.subr.mxu0 0.0
    %1418 = vmatpush1.msra.mxu0 0.0
    %1419 = vmatprep.subr.mxu0 0.0
    %1420 = vmatpush1.msra.mxu0 0.0
    %1421 = vmatprep.subr.mxu0 0.0
    %1422 = vmatpush1.msra.mxu0 0.0
    %1423 = vmatprep.subr.mxu0 0.0
    %1424 = vmatpush1.msra.mxu0 0.0
    %1425 = vmatprep.subr.mxu0 0.0
    %1426 = vmatpush1.msra.mxu0 0.0
    %1427 = vmatprep.subr.mxu0 0.0
    %1428 = vmatpush1.msra.mxu0 0.0
    %1429 = vmatprep.subr.mxu0 0.0
    %1430 = vmatpush1.msra.mxu0 0.0
    %1431 = vmatprep.subr.mxu0 0.0
    %1432 = vmatpush1.msra.mxu0 0.0
    %1433 = vmatprep.subr.mxu0 0.0
    %1434 = vmatpush1.msra.mxu0 0.0
    %1435 = vmatprep.subr.mxu0 0.0
    %1436 = vmatpush1.msra.mxu0 0.0
    %1437 = vmatprep.subr.mxu0 0.0
    %1438 = vmatpush1.msra.mxu0 0.0
    %1439 = vmatprep.subr.mxu0 0.0
    %1440 = vmatpush1.msra.mxu0 0.0
    %1441 = vmatprep.mubr.f32.mxu0 0.0
    %1442 = vmatmul.mubr.f32.gmra.mrb[0].mxu0 %v1375
    %v1443 = vpop.f32.mrb[0].mxu0
    %v1444 = vadd.f32 0.0, %v1443
    %v1445 = vpop.f32.mrb[0].mxu0
    %v1446 = vadd.f32 0.0, %v1445
    %1447 = vdwg.mxu0
    %v1448 = vadd.f32 %v1362, %v1444
    %v1449 = vadd.f32 %v1363, %v1446
    %1450 = vrot.lane.b32.xlu0 %v859, 112
    %v1451 = vpop.permute.xlu0 %1450
    %1452 = vrot.lane.b32.xlu0 %v860, 112
    %v1453 = vpop.permute.xlu0 %1452
    %v1454 = vsel %vm670, %v1451, %v1453
    %v1455 = vsel %vm670, %v1453, %v1451
    %v1456 = vmul.f32 %v1454, %v62
    %v1457 = vmul.f32 %v1455, %v63
    %s1458 = scalar_lea.vmem %s2, 56
    %v1459 = vld [vmem:[%s1458] sm:$0xff]
    %v1461 = vsel %vm82, %v1459, 0
    %1463 = vmatprep.subr.mxu0 %v1457
    %1464 = vmatpush1.msra.mxu0 %v1456
    %1465 = vmatprep.subr.mxu0 0.0
    %1466 = vmatpush1.msra.mxu0 0.0
    %1467 = vmatprep.subr.mxu0 0.0
    %1468 = vmatpush1.msra.mxu0 0.0
    %1469 = vmatprep.subr.mxu0 0.0
    %1470 = vmatpush1.msra.mxu0 0.0
    %1471 = vmatprep.subr.mxu0 0.0
    %1472 = vmatpush1.msra.mxu0 0.0
    %1473 = vmatprep.subr.mxu0 0.0
    %1474 = vmatpush1.msra.mxu0 0.0
    %1475 = vmatprep.subr.mxu0 0.0
    %1476 = vmatpush1.msra.mxu0 0.0
    %1477 = vmatprep.subr.mxu0 0.0
    %1478 = vmatpush1.msra.mxu0 0.0
    %1479 = vmatprep.subr.mxu0 0.0
    %1480 = vmatpush1.msra.mxu0 0.0
    %1481 = vmatprep.subr.mxu0 0.0
    %1482 = vmatpush1.msra.mxu0 0.0
    %1483 = vmatprep.subr.mxu0 0.0
    %1484 = vmatpush1.msra.mxu0 0.0
    %1485 = vmatprep.subr.mxu0 0.0
    %1486 = vmatpush1.msra.mxu0 0.0
    %1487 = vmatprep.subr.mxu0 0.0
    %1488 = vmatpush1.msra.mxu0 0.0
    %1489 = vmatprep.subr.mxu0 0.0
    %1490 = vmatpush1.msra.mxu0 0.0
    %1491 = vmatprep.subr.mxu0 0.0
    %1492 = vmatpush1.msra.mxu0 0.0
    %1493 = vmatprep.subr.mxu0 0.0
    %1494 = vmatpush1.msra.mxu0 0.0
    %1495 = vmatprep.subr.mxu0 0.0
    %1496 = vmatpush1.msra.mxu0 0.0
    %1497 = vmatprep.subr.mxu0 0.0
    %1498 = vmatpush1.msra.mxu0 0.0
    %1499 = vmatprep.subr.mxu0 0.0
    %1500 = vmatpush1.msra.mxu0 0.0
    %1501 = vmatprep.subr.mxu0 0.0
    %1502 = vmatpush1.msra.mxu0 0.0
    %1503 = vmatprep.subr.mxu0 0.0
    %1504 = vmatpush1.msra.mxu0 0.0
    %1505 = vmatprep.subr.mxu0 0.0
    %1506 = vmatpush1.msra.mxu0 0.0
    %1507 = vmatprep.subr.mxu0 0.0
    %1508 = vmatpush1.msra.mxu0 0.0
    %1509 = vmatprep.subr.mxu0 0.0
    %1510 = vmatpush1.msra.mxu0 0.0
    %1511 = vmatprep.subr.mxu0 0.0
    %1512 = vmatpush1.msra.mxu0 0.0
    %1513 = vmatprep.subr.mxu0 0.0
    %1514 = vmatpush1.msra.mxu0 0.0
    %1515 = vmatprep.subr.mxu0 0.0
    %1516 = vmatpush1.msra.mxu0 0.0
    %1517 = vmatprep.subr.mxu0 0.0
    %1518 = vmatpush1.msra.mxu0 0.0
    %1519 = vmatprep.subr.mxu0 0.0
    %1520 = vmatpush1.msra.mxu0 0.0
    %1521 = vmatprep.subr.mxu0 0.0
    %1522 = vmatpush1.msra.mxu0 0.0
    %1523 = vmatprep.subr.mxu0 0.0
    %1524 = vmatpush1.msra.mxu0 0.0
    %1525 = vmatprep.subr.mxu0 0.0
    %1526 = vmatpush1.msra.mxu0 0.0
    %1527 = vmatprep.mubr.f32.mxu0 0.0
    %1528 = vmatmul.mubr.f32.gmra.mrb[0].mxu0 %v1461
    %v1529 = vpop.f32.mrb[0].mxu0
    %v1530 = vadd.f32 0.0, %v1529
    %v1531 = vpop.f32.mrb[0].mxu0
    %v1532 = vadd.f32 0.0, %v1531
    %1533 = vdwg.mxu0
    %v1534 = vadd.f32 %v1448, %v1530
    %v1535 = vadd.f32 %v1449, %v1532
    %1536 = vrot.lane.b32.xlu0 %v859, 111
    %v1537 = vpop.permute.xlu0 %1536
    %1538 = vrot.lane.b32.xlu0 %v860, 111
    %v1539 = vpop.permute.xlu0 %1538
    %v1540 = vsel %vm757, %v1537, %v1539
    %v1541 = vsel %vm757, %v1539, %v1537
    %v1542 = vmul.f32 %v1540, %v68
    %v1543 = vmul.f32 %v1541, %v69
    %s1544 = scalar_lea.vmem %s2, 64
    %v1545 = vld [vmem:[%s1544] sm:$0xff]
    %v1547 = vsel %vm82, %v1545, 0
    %1549 = vmatprep.subr.mxu0 %v1543
    %1550 = vmatpush1.msra.mxu0 %v1542
    %1551 = vmatprep.subr.mxu0 0.0
    %1552 = vmatpush1.msra.mxu0 0.0
    %1553 = vmatprep.subr.mxu0 0.0
    %1554 = vmatpush1.msra.mxu0 0.0
    %1555 = vmatprep.subr.mxu0 0.0
    %1556 = vmatpush1.msra.mxu0 0.0
    %1557 = vmatprep.subr.mxu0 0.0
    %1558 = vmatpush1.msra.mxu0 0.0
    %1559 = vmatprep.subr.mxu0 0.0
    %1560 = vmatpush1.msra.mxu0 0.0
    %1561 = vmatprep.subr.mxu0 0.0
    %1562 = vmatpush1.msra.mxu0 0.0
    %1563 = vmatprep.subr.mxu0 0.0
    %1564 = vmatpush1.msra.mxu0 0.0
    %1565 = vmatprep.subr.mxu0 0.0
    %1566 = vmatpush1.msra.mxu0 0.0
    %1567 = vmatprep.subr.mxu0 0.0
    %1568 = vmatpush1.msra.mxu0 0.0
    %1569 = vmatprep.subr.mxu0 0.0
    %1570 = vmatpush1.msra.mxu0 0.0
    %1571 = vmatprep.subr.mxu0 0.0
    %1572 = vmatpush1.msra.mxu0 0.0
    %1573 = vmatprep.subr.mxu0 0.0
    %1574 = vmatpush1.msra.mxu0 0.0
    %1575 = vmatprep.subr.mxu0 0.0
    %1576 = vmatpush1.msra.mxu0 0.0
    %1577 = vmatprep.subr.mxu0 0.0
    %1578 = vmatpush1.msra.mxu0 0.0
    %1579 = vmatprep.subr.mxu0 0.0
    %1580 = vmatpush1.msra.mxu0 0.0
    %1581 = vmatprep.subr.mxu0 0.0
    %1582 = vmatpush1.msra.mxu0 0.0
    %1583 = vmatprep.subr.mxu0 0.0
    %1584 = vmatpush1.msra.mxu0 0.0
    %1585 = vmatprep.subr.mxu0 0.0
    %1586 = vmatpush1.msra.mxu0 0.0
    %1587 = vmatprep.subr.mxu0 0.0
    %1588 = vmatpush1.msra.mxu0 0.0
    %1589 = vmatprep.subr.mxu0 0.0
    %1590 = vmatpush1.msra.mxu0 0.0
    %1591 = vmatprep.subr.mxu0 0.0
    %1592 = vmatpush1.msra.mxu0 0.0
    %1593 = vmatprep.subr.mxu0 0.0
    %1594 = vmatpush1.msra.mxu0 0.0
    %1595 = vmatprep.subr.mxu0 0.0
    %1596 = vmatpush1.msra.mxu0 0.0
    %1597 = vmatprep.subr.mxu0 0.0
    %1598 = vmatpush1.msra.mxu0 0.0
    %1599 = vmatprep.subr.mxu0 0.0
    %1600 = vmatpush1.msra.mxu0 0.0
    %1601 = vmatprep.subr.mxu0 0.0
    %1602 = vmatpush1.msra.mxu0 0.0
    %1603 = vmatprep.subr.mxu0 0.0
    %1604 = vmatpush1.msra.mxu0 0.0
    %1605 = vmatprep.subr.mxu0 0.0
    %1606 = vmatpush1.msra.mxu0 0.0
    %1607 = vmatprep.subr.mxu0 0.0
    %1608 = vmatpush1.msra.mxu0 0.0
    %1609 = vmatprep.subr.mxu0 0.0
    %1610 = vmatpush1.msra.mxu0 0.0
    %1611 = vmatprep.subr.mxu0 0.0
    %1612 = vmatpush1.msra.mxu0 0.0
    %1613 = vmatprep.mubr.f32.mxu0 0.0
    %1614 = vmatmul.mubr.f32.gmra.mrb[0].mxu0 %v1547
    %v1615 = vpop.f32.mrb[0].mxu0
    %v1616 = vadd.f32 0.0, %v1615
    %v1617 = vpop.f32.mrb[0].mxu0
    %v1618 = vadd.f32 0.0, %v1617
    %1619 = vdwg.mxu0
    %v1620 = vadd.f32 %v1534, %v1616
    %v1621 = vadd.f32 %v1535, %v1618
    %v1622 = vadd.f32 %v1620, %v1621
    %1623 = vadd.xlane.f32.xlu0 %v1622
    %v1624 = vpop.xlane.xlu0 %1623
    %v1625 = vmul.f32 %v1620, %v1620
    %v1626 = vmul.f32 %v1621, %v1621
    %v1627 = vadd.f32 %v1625, %v1626
    %1628 = vadd.xlane.f32.xlu0 %v1627
    %v1629 = vpop.xlane.xlu0 %1628
    %v1630 = vmul.f32 %v1624, 0.00390625
    %v1631 = vmul.f32 %v1629, 0.00390625
    %v1632 = vmul.f32 %v1630, %v1630
    %v1633 = vsub.f32 %v1631, %v1632
    %v1634 = vmax.f32 %v1633, 0.0
    %v1635 = vsub.f32 %v1620, %v1630
    %v1636 = vsub.f32 %v1621, %v1630
    %v1637 = vadd.f32 %v1634, 1e-05
    %v1638 = vrsqrt.pop %v1637
    %v1639 = vmul.f32 %v1635, %v1638
    %v1640 = vmul.f32 %v1636, %v1638
    %v1641 = vmax.f32 %v1639, 0.0
    %v1642 = vmax.f32 %v1640, 0.0
    %v1643 = vadd.f32 %v15, %v1641
    %v1644 = vadd.f32 %v16, %v1642
    %1645 = vst [vmem:[#allocation2] sm:$0xff] %v1643
    %1646 = vst [vmem:[#allocation2 + $0x8] sm:$0xff] %v1644
    // Predicated region
    $region14: #{tpu_custom_call.1} parent=1 // pred_check
      _
    $region15: #{tpu_custom_call.1} parent=1 // pred_check_branch
      %1648 = sbr.rel (0) target = $region17
    $region16: #{tpu_custom_call.1} parent=1 // pred_region
      %s1650 = ssub.s32 256, 256
      %1651 = vsyncadd [#allocation3], %s1650
      %s1653 = sshll.u32 [#allocation2], 4
      %s1654 = int_to_ptr.vmem [resolvable:$true] %s1653
      %1656 = dma.vmem_to_hbm [thread:$0]  %s1654, 256, %s3, [#allocation3]
    $region17: #{tpu_custom_call.1} parent=1 // pred_fallthru
      _
    // Predicated region
    $region18: #{tpu_custom_call.1} parent=1 // pred_check
      _
    $region19: #{tpu_custom_call.1} parent=1 // pred_check_branch
      %1658 = sbr.rel (0) target = $region21
    $region20: #{tpu_custom_call.1} parent=1 // pred_region
      %1659 = dma.done [#allocation3], 256
    $region21: #{tpu_custom_call.1} parent=1 // pred_fallthru
      _
    %1660 = vsyncpa [#allocation3], 1

</llo_original>
